<compile_context>
chip_gen: v7x
topology: tpu7x:2x2x1
jax: 0.10.0
libtpu: 0.0.40
codegen_flags: <defaults>
</compile_context>

<pallas_src>
import functools
import math

import jax
import jax.numpy as jnp
from jax.experimental import pallas as pl
from jax.experimental.pallas import tpu as pltpu


def _round_up(x, m):
    return ((x + m - 1) // m) * m


def _cdiv(a, b):
    return (a + b - 1) // b


def _vmem_limit_bytes():
    """Per-generation VMEM limit: ~3/4 of physical (96 MiB on v5e/v6e's
    128 MiB, 48 MiB on v7x's 64 MiB), conservative fallback if unavailable."""
    try:
        cap = int(pltpu.get_tpu_info().vmem_capacity_bytes)
    except Exception:
        cap = 64 * 1024 * 1024
    return max(32 * 1024 * 1024, min(3 * cap // 4, 96 * 1024 * 1024))


def _plan_tiles(n_batch, h, w, kp, nc, vmem_limit):
    """Pick row tile th and number of row tiles (padded height = th*n_tiles)."""
    r16w = _round_up(w, 16)
    # Per-tile-row working set, counting lane padding to 128 (bf16 data):
    per_row = (
        10 * r16w * 128 * 2                       # 9 taps + K-pad fragment
        + r16w * _round_up(kp, 128) * 2           # concatenated im2col patches
        + 2 * w * _round_up(nc, 128) * 4          # f32 accumulator + sin temp
        + 2 * r16w * 128 * 2                      # double-buffered bf16 output
    )
    # Whole padded image is VMEM-resident across row tiles (double-buffered).
    resident_in = 2 * (h + 4) * _round_up(w + 2, 16) * 128 * 2
    budget = max(2 * 1024 * 1024, (vmem_limit - resident_in) // 2)
    th = max(1, min(h, budget // per_row))
    n_tiles = _cdiv(h, th)
    # Only force a split when the whole grid would have < 2 steps (keeps the
    # second TensorCore busy on v7x with batch==1; no-op overhead elsewhere).
    if n_batch * n_tiles < 2 and h >= 2:
        n_tiles = 2
    th = _cdiv(h, n_tiles)
    # Keep M = th*w a multiple of 8 (unmasked sublane feed into the MXU).
    th = _round_up(th, 8 // math.gcd(w, 8))
    return th, n_tiles


def _pack_phase_weights(weight, bias, cout, cin, kp, w0):
    """Phase-packed weights (kp, 4*cout) bf16 and bias (1, 4*cout) f32.

    weight: (Cout, Cin, 3, 3) PyTorch Conv2d layout; bias: (Cout,).
    Phase (a, b) = output-pixel parity after 2x nearest upsample.  Its
    effective 2x2 kernel is a sum of the 3x3 taps; tap (r2, c2) is scattered
    into padded-offset slot (r2+a, c2+b) and channel block (2a+b)*cout.
    w0 is folded in here (sin(w0*(Wx+b)) == sin((w0 W)x + w0 b)).
    K rows beyond 9*cin are zero (lane-aligned contraction dim).
    """
    nc = 4 * cout
    wk = (w0 * jnp.transpose(weight, (2, 3, 1, 0))).astype(jnp.float32)  # (kh,kw,ci,co)
    row_comb = [
        jnp.stack([wk[0], wk[1] + wk[2]], axis=0),        # a = 0
        jnp.stack([wk[0] + wk[1], wk[2]], axis=0),        # a = 1
    ]
    w_all = jnp.zeros((3, 3, cin, nc), dtype=jnp.float32)
    for a in (0, 1):
        ra = row_comb[a]                                   # (2, 3, ci, co)
        col_comb = [
            jnp.stack([ra[:, 0], ra[:, 1] + ra[:, 2]], axis=1),   # b = 0
            jnp.stack([ra[:, 0] + ra[:, 1], ra[:, 2]], axis=1),   # b = 1
        ]
        for b in (0, 1):
            wab = col_comb[b]                              # (2, 2, ci, co)
            ph = (2 * a + b) * cout
            for r2 in (0, 1):
                for c2 in (0, 1):
                    w_all = w_all.at[r2 + a, c2 + b, :, ph:ph + cout].set(wab[r2, c2])
    w_flat = w_all.reshape(9 * cin, nc)
    w_packed = jnp.zeros((kp, nc), jnp.float32).at[:9 * cin].set(w_flat)
    w_packed = w_packed.astype(jnp.bfloat16)
    b_packed = (w0 * jnp.tile(bias, 4)).reshape(1, nc).astype(jnp.float32)
    return w_packed, b_packed


def _upsample_conv3x3_sine_kernel(x_ref, w_ref, b_ref, o_ref, *, th, width, cin, kp):
    """Fused nearest-2x upsample + 3x3 conv (pad=1) + sin for one row tile.

    x_ref: (1, hp+2, w+2, cin)  bf16, zero-padded ORIGINAL-resolution image
                                (VMEM-resident across the row-tile grid axis)
    w_ref: (kp, 4*cout)         bf16 phase-packed weights, kp = roundup(9*cin,128)
    b_ref: (1, 4*cout)          f32 phase-packed bias (w0 folded in)
    o_ref: (1, th, width, 4*cout) bf16 phase-packed output
    """
    nc = o_ref.shape[-1]
    r0 = pl.multiple_of(pl.program_id(1) * th, th)          # first original row of tile

    # im2col slab: one dynamic row-slice per kernel-row tap, static column
    # taps, plus a zero fragment so K is exactly kp (multiple of 128) ->
    # the reshape is a retiling no-op and the MXU LHS is unmasked.
    taps = []
    for dr in range(3):
        rows = x_ref[0, pl.ds(r0 + dr, th), :, :]           # (th, w+2, cin) bf16
        for dc in range(3):
            taps.append(rows[:, dc:dc + width, :])          # (th, width, cin)
    if kp > 9 * cin:
        taps.append(jnp.zeros((th, width, kp - 9 * cin), jnp.bfloat16))
    patches = jnp.concatenate(taps, axis=-1).reshape(th * width, kp)

    # Single MXU matmul for all 4 phases: bf16 operands, f32 accumulation.
    acc = jnp.dot(patches, w_ref[...], preferred_element_type=jnp.float32)
    # Bias + sine only on the 4*cout valid lanes (no padding lanes exist).
    y = jnp.sin(acc + b_ref[...])
    o_ref[0] = y.reshape(th, width, nc).astype(o_ref.dtype)


def conv_recover_block_forward_phase_packed(x_nhwc, weight, bias, *, w0=1.0,
                                            row_tile=None):
    """x_nhwc: (N, h, w, Cin) -> phase-packed (N, h, w, 4*Cout) bf16.

    Last dim ordering is [a (row parity), b (col parity), Cout]; the final
    upsampled pixel (2i+a, 2j+b, co) equals out[n, i, j, (2a+b)*Cout + co].
    Downstream NHWC consumers can use this layout directly (no relayout pass).
    """
    N, h, w, Cin = x_nhwc.shape
    Cout = weight.shape[0]
    nc = 4 * Cout
    kp = _round_up(9 * Cin, 128)
    vmem_limit = _vmem_limit_bytes()
    if row_tile is None:
        th, n_tiles = _plan_tiles(N, h, w, kp, nc, vmem_limit)
    else:
        th, n_tiles = int(row_tile), _cdiv(h, int(row_tile))
    hp = th * n_tiles                                        # padded height

    w_packed, b_packed = _pack_phase_weights(weight, bias, Cout, Cin, kp, w0)

    # Only the pad=1 ring (plus hp-h extra zero rows so th divides) of the
    # ORIGINAL image is materialized; the 4x-larger upsampled tensor never
    # exists.  bf16 cast halves the input HBM traffic.
    x_pad = jnp.pad(x_nhwc.astype(jnp.bfloat16),
                    ((0, 0), (1, 1 + hp - h), (1, 1), (0, 0)))

    kernel = functools.partial(_upsample_conv3x3_sine_kernel,
                               th=th, width=w, cin=Cin, kp=kp)
    out_k = pl.pallas_call(
        kernel,
        out_shape=jax.ShapeDtypeStruct((N, hp, w, nc), jnp.bfloat16),
        grid_spec=pltpu.PrefetchScalarGridSpec(
            num_scalar_prefetch=0,
            grid=(N, n_tiles),
            in_specs=[
                # Whole padded original image; index_map ignores the row-tile
                # axis -> fetched from HBM once per batch element, reused.
                pl.BlockSpec((1, hp + 2, w + 2, Cin), lambda n, t: (n, 0, 0, 0)),
                pl.BlockSpec((kp, nc), lambda n, t: (0, 0)),
                pl.BlockSpec((1, nc), lambda n, t: (0, 0)),
            ],
            out_specs=pl.BlockSpec((1, th, w, nc), lambda n, t: (n, t, 0, 0)),
        ),
        compiler_params=pltpu.CompilerParams(
            dimension_semantics=("parallel", "parallel"),
            vmem_limit_bytes=vmem_limit,
        ),
    )(x_pad, w_packed, b_packed)

    return out_k[:, :h] if hp != h else out_k


def conv_recover_block_forward_nhwc(x_nhwc, weight, bias, *, w0=1.0, row_tile=None):
    """x_nhwc: (N, h, w, Cin) -> (N, 2h, 2w, Cout) bf16 (NHWC)."""
    N, h, w, _ = x_nhwc.shape
    Cout = weight.shape[0]
    pk = conv_recover_block_forward_phase_packed(x_nhwc, weight, bias,
                                                 w0=w0, row_tile=row_tile)
    y = pk.reshape(N, h, w, 2, 2, Cout)
    # (n, i, j, a, b, co) -> (n, 2i+a, 2j+b, co): single transpose pass on bf16.
    return jnp.transpose(y, (0, 1, 3, 2, 4, 5)).reshape(N, 2 * h, 2 * w, Cout)


def conv_recover_block_forward(x_nchw, weight, bias, *, w0=1.0, row_tile=None):
    """NCHW f32 boundary matching the PyTorch module.  The depth-to-space and
    the NHWC->NCHW relayout are fused into ONE transpose over the minimal-size
    bf16 phase-packed tensor."""
    N, Cin, h, w = x_nchw.shape
    Cout = weight.shape[0]
    pk = conv_recover_block_forward_phase_packed(
        jnp.transpose(x_nchw, (0, 2, 3, 1)), weight, bias, w0=w0, row_tile=row_tile)
    y = pk.reshape(N, h, w, 2, 2, Cout)
    # (n, i, j, a, b, co) -> (n, co, 2i+a, 2j+b)
    y = jnp.transpose(y, (0, 5, 1, 3, 2, 4)).reshape(N, Cout, 2 * h, 2 * w)
    return y.astype(jnp.float32)


def _reference_forward(x_nchw, weight, bias, *, w0=1.0, scale=2):
    """Pure-JAX f32 reference: nearest-2x upsample -> conv3x3(pad=1) -> sin."""
    x = jnp.repeat(jnp.repeat(x_nchw, scale, axis=2), scale, axis=3)
    y = jax.lax.conv_general_dilated(
        x, weight, window_strides=(1, 1), padding=((1, 1), (1, 1)),
        dimension_numbers=("NCHW", "OIHW", "NCHW"))
    y = y + bias[None, :, None, None]
    return jnp.sin(w0 * y)


if __name__ == "__main__":
    key = jax.random.PRNGKey(0)
    k_x, k_w, k_b, k_x2, k_w2, k_b2 = jax.random.split(key, 6)

    # Test 1: batch=2, inch=4, outch=8, 8x8 input (conv runs at upsampled 16x16).
    N, Cin, Cout, h, w = 2, 4, 8, 8, 8
    x = jax.random.normal(k_x, (N, Cin, h, w), dtype=jnp.float32)
    weight = jax.random.normal(k_w, (Cout, Cin, 3, 3), dtype=jnp.float32) * 0.1
    bias = jax.random.normal(k_b, (Cout,), dtype=jnp.float32) * 0.1

    fwd = jax.jit(functools.partial(conv_recover_block_forward, w0=1.0))
    out = jax.block_until_ready(fwd(x, weight, bias))
    assert out.shape == (N, Cout, 2 * h, 2 * w), out.shape
    ref = jax.block_until_ready(_reference_forward(x, weight, bias, w0=1.0))
    err = float(jnp.max(jnp.abs(out - ref)))
    # bf16 MXU inputs + bf16 output store with f32 accumulation.
    assert err < 4e-2, err

    # Test 2: batch=1, odd Cout, non-dividing row tile (padded h), w0 != 1.
    N2, Cin2, Cout2, h2, w2 = 1, 4, 6, 12, 8
    x2 = jax.random.normal(k_x2, (N2, Cin2, h2, w2), dtype=jnp.float32)
    weight2 = jax.random.normal(k_w2, (Cout2, Cin2, 3, 3), dtype=jnp.float32) * 0.1
    bias2 = jax.random.normal(k_b2, (Cout2,), dtype=jnp.float32) * 0.1
    fwd2 = jax.jit(functools.partial(conv_recover_block_forward, w0=0.7, row_tile=5))
    out2 = jax.block_until_ready(fwd2(x2, weight2, bias2))
    ref2 = jax.block_until_ready(_reference_forward(x2, weight2, bias2, w0=0.7))
    assert out2.shape == ref2.shape, (out2.shape, ref2.shape)
    err2 = float(jnp.max(jnp.abs(out2 - ref2)))
    assert err2 < 4e-2, err2

    print("KERNEL_OK")
</pallas_src>

<mosaic_0001>
module attributes {stable_mosaic.version = 11 : i64} {
  func.func @_upsample_conv3x3_sine_kernel(%arg0: i32, %arg1: i32, %arg2: memref<1x10x10x4xbf16, #tpu.memory_space<vmem>>, %arg3: memref<128x32xbf16, #tpu.memory_space<vmem>>, %arg4: memref<1x32xf32, #tpu.memory_space<vmem>>, %arg5: memref<1x8x8x32xbf16, #tpu.memory_space<vmem>>) attributes {dimension_semantics = [#tpu.dimension_semantics<parallel>, #tpu.dimension_semantics<parallel>], iteration_bounds = array<i64: 2, 1>, scalar_prefetch = 0 : i64, scratch_operands = 0 : i64, tpu.core_type = #tpu.core_type<tc>, window_params = [{transform_indices = @transform_0, window_bounds = array<i64: 1, 10, 10, 4>}, {pipeline_mode = #tpu.pipeline_mode<synchronous>, transform_indices = @transform_1, window_bounds = array<i64: 128, 32>}, {pipeline_mode = #tpu.pipeline_mode<synchronous>, transform_indices = @transform_2, window_bounds = array<i64: 1, 32>}, {transform_indices = @transform_3, window_bounds = array<i64: 1, 8, 8, 32>}]} {
    %c8_i32 = arith.constant 8 : i32
    %0 = arith.muli %arg1, %c8_i32 : i32
    %1 = tpu.assume_multiple %0, 8 : i32
    %c0_i32 = arith.constant 0 : i32
    %2 = arith.addi %1, %c0_i32 : i32
    %c0 = arith.constant 0 : index
    %3 = arith.index_cast %2 : i32 to index
    %c0_0 = arith.constant 0 : index
    %c0_1 = arith.constant 0 : index
    %4 = vector.load %arg2[%c0, %3, %c0_0, %c0_1] : memref<1x10x10x4xbf16, #tpu.memory_space<vmem>>, vector<1x8x10x4xbf16>
    %5 = vector.shape_cast %4 : vector<1x8x10x4xbf16> to vector<8x10x4xbf16>
    %6 = vector.extract_strided_slice %5 {offsets = [0, 0, 0], sizes = [8, 8, 4], strides = [1, 1, 1]} : vector<8x10x4xbf16> to vector<8x8x4xbf16>
    %7 = vector.extract_strided_slice %5 {offsets = [0, 1, 0], sizes = [8, 8, 4], strides = [1, 1, 1]} : vector<8x10x4xbf16> to vector<8x8x4xbf16>
    %8 = vector.extract_strided_slice %5 {offsets = [0, 2, 0], sizes = [8, 8, 4], strides = [1, 1, 1]} : vector<8x10x4xbf16> to vector<8x8x4xbf16>
    %c1_i32 = arith.constant 1 : i32
    %9 = arith.addi %1, %c1_i32 : i32
    %c0_2 = arith.constant 0 : index
    %10 = arith.index_cast %9 : i32 to index
    %c0_3 = arith.constant 0 : index
    %c0_4 = arith.constant 0 : index
    %11 = vector.load %arg2[%c0_2, %10, %c0_3, %c0_4] : memref<1x10x10x4xbf16, #tpu.memory_space<vmem>>, vector<1x8x10x4xbf16>
    %12 = vector.shape_cast %11 : vector<1x8x10x4xbf16> to vector<8x10x4xbf16>
    %13 = vector.extract_strided_slice %12 {offsets = [0, 0, 0], sizes = [8, 8, 4], strides = [1, 1, 1]} : vector<8x10x4xbf16> to vector<8x8x4xbf16>
    %14 = vector.extract_strided_slice %12 {offsets = [0, 1, 0], sizes = [8, 8, 4], strides = [1, 1, 1]} : vector<8x10x4xbf16> to vector<8x8x4xbf16>
    %15 = vector.extract_strided_slice %12 {offsets = [0, 2, 0], sizes = [8, 8, 4], strides = [1, 1, 1]} : vector<8x10x4xbf16> to vector<8x8x4xbf16>
    %c2_i32 = arith.constant 2 : i32
    %16 = arith.addi %1, %c2_i32 : i32
    %c0_5 = arith.constant 0 : index
    %17 = arith.index_cast %16 : i32 to index
    %c0_6 = arith.constant 0 : index
    %c0_7 = arith.constant 0 : index
    %18 = vector.load %arg2[%c0_5, %17, %c0_6, %c0_7] : memref<1x10x10x4xbf16, #tpu.memory_space<vmem>>, vector<1x8x10x4xbf16>
    %19 = vector.shape_cast %18 : vector<1x8x10x4xbf16> to vector<8x10x4xbf16>
    %20 = vector.extract_strided_slice %19 {offsets = [0, 0, 0], sizes = [8, 8, 4], strides = [1, 1, 1]} : vector<8x10x4xbf16> to vector<8x8x4xbf16>
    %21 = vector.extract_strided_slice %19 {offsets = [0, 1, 0], sizes = [8, 8, 4], strides = [1, 1, 1]} : vector<8x10x4xbf16> to vector<8x8x4xbf16>
    %22 = vector.extract_strided_slice %19 {offsets = [0, 2, 0], sizes = [8, 8, 4], strides = [1, 1, 1]} : vector<8x10x4xbf16> to vector<8x8x4xbf16>
    %cst = arith.constant 0.000000e+00 : bf16
    %23 = vector.broadcast %cst : bf16 to vector<8x8x92xbf16>
    %24 = tpu.concatenate %6, %7, %8, %13, %14, %15, %20, %21, %22, %23 in 2 : vector<8x8x4xbf16>, vector<8x8x4xbf16>, vector<8x8x4xbf16>, vector<8x8x4xbf16>, vector<8x8x4xbf16>, vector<8x8x4xbf16>, vector<8x8x4xbf16>, vector<8x8x4xbf16>, vector<8x8x4xbf16>, vector<8x8x92xbf16> -> vector<8x8x128xbf16>
    %25 = vector.shape_cast %24 : vector<8x8x128xbf16> to vector<64x128xbf16>
    %c0_8 = arith.constant 0 : index
    %c0_9 = arith.constant 0 : index
    %26 = vector.load %arg3[%c0_8, %c0_9] : memref<128x32xbf16, #tpu.memory_space<vmem>>, vector<128x32xbf16>
    %cst_10 = arith.constant dense<0.000000e+00> : vector<64x32xf32>
    %27 = tpu.matmul %25, %26, %cst_10 {dimension_numbers = #tpu.dot_dimension_numbers<[1], [0], [0], [1], [0, 0, 1, 1], [], []>} : vector<64x128xbf16>, vector<128x32xbf16>, vector<64x32xf32> -> vector<64x32xf32>
    %c0_11 = arith.constant 0 : index
    %c0_12 = arith.constant 0 : index
    %28 = vector.load %arg4[%c0_11, %c0_12] : memref<1x32xf32, #tpu.memory_space<vmem>>, vector<1x32xf32>
    %29 = vector.broadcast %28 : vector<1x32xf32> to vector<64x32xf32>
    %30 = arith.addf %27, %29 : vector<64x32xf32>
    %31 = math.sin %30 : vector<64x32xf32>
    %32 = vector.shape_cast %31 : vector<64x32xf32> to vector<8x8x32xf32>
    %33 = arith.truncf %32 : vector<8x8x32xf32> to vector<8x8x32xbf16>
    %c0_13 = arith.constant 0 : index
    %c0_14 = arith.constant 0 : index
    %c0_15 = arith.constant 0 : index
    %c0_16 = arith.constant 0 : index
    %34 = vector.load %arg5[%c0_13, %c0_14, %c0_15, %c0_16] : memref<1x8x8x32xbf16, #tpu.memory_space<vmem>>, vector<1x8x8x32xbf16>
    %35 = vector.shape_cast %34 : vector<1x8x8x32xbf16> to vector<8x8x32xbf16>
    %36 = vector.shape_cast %33 : vector<8x8x32xbf16> to vector<1x8x8x32xbf16>
    tpu.vector_store %arg5[%c0_13, %c0_14, %c0_15, %c0_16], %36 {strides = array<i32>} : memref<1x8x8x32xbf16, #tpu.memory_space<vmem>>, vector<1x8x8x32xbf16>,
    return
  }
  func.func @transform_0(%arg0: i32, %arg1: i32) -> (i32, i32, i32, i32) {
    %c0_i32 = arith.constant 0 : i32
    %c0_i32_0 = arith.constant 0 : i32
    %c0_i32_1 = arith.constant 0 : i32
    %c0_i32_2 = arith.constant 0 : i32
    return %arg0, %c0_i32, %c0_i32_0, %c0_i32_1 : i32, i32, i32, i32
  }
  func.func @transform_1(%arg0: i32, %arg1: i32) -> (i32, i32) {
    %c0_i32 = arith.constant 0 : i32
    %c0_i32_0 = arith.constant 0 : i32
    %c0_i32_1 = arith.constant 0 : i32
    return %c0_i32, %c0_i32_0 : i32, i32
  }
  func.func @transform_2(%arg0: i32, %arg1: i32) -> (i32, i32) {
    %c0_i32 = arith.constant 0 : i32
    %c0_i32_0 = arith.constant 0 : i32
    %c0_i32_1 = arith.constant 0 : i32
    return %c0_i32, %c0_i32_0 : i32, i32
  }
  func.func @transform_3(%arg0: i32, %arg1: i32) -> (i32, i32, i32, i32) {
    %c0_i32 = arith.constant 0 : i32
    %c0_i32_0 = arith.constant 0 : i32
    %c0_i32_1 = arith.constant 0 : i32
    return %arg0, %arg1, %c0_i32, %c0_i32_0 : i32, i32, i32, i32
  }
}

</mosaic_0001>

<llo_original>
// kernel: tile.8
$region0: #{tile.8}
  #allocation0 [shape = 's32[1]{0}', space=sflag, size = 0x4, scoped, tag = 'scoped memory for tile.8']
  %s0 = inlined_call_operand.vmem [shape: f32[8], index: 0, kind: input, shape index: {}]
  %s1 = inlined_call_operand.vmem [shape: f32[4,8], index: 1, kind: output, shape index: {}]
  // Predicated region
  $region2: #{tile.8} parent=0 // pred_check
    _
  $region3: #{tile.8} parent=0 // pred_check_branch
    %3 = sbr.rel (0) target = $region5
  $region4: #{tile.8} parent=0 // pred_region
    _
  $region5: #{tile.8} parent=0 // pred_fallthru
    _
  %v4 = vld [vmem:[%s0] ss:$0 sm:$0xff]
  %5 = vst [vmem:[%s1] sm:$0xf] %v4

// kernel: tile.9
$region0: #{tile.9}
  %s0 = inlined_call_operand.vmem [shape: f32[4,8], index: 0, kind: input, shape index: {}]
  %s1 = inlined_call_operand.vmem [shape: f32[1,32], index: 1, kind: output, shape index: {}]
  $region1: #{tile.9} parent=0
    #allocation0 [shape = 'u8[4096]{0}', space=vmem, size = 0x1000, scoped, tag = 'scoped mem for output reshape']
    #allocation1 [shape = 'u8[4096]{0}', space=vmem, size = 0x1000, scoped, tag = 'scoped mem for input reshape']
    %s3 = sshllo.u32 0, 4
    %v4 = vld [vmem:[%s0] sm:%s3]
    %5 = vst [vmem:[#allocation1] sm:%s3] %v4
    %v6 = vld [vmem:[#allocation1] sm:$0x1]
    %vm7 = vcmask 64512
    %8 = vst.msk [vmem:[#allocation0] sm:$0x1] %vm7, %v6
    %s9 = scalar_lea.vmem [#allocation1], 3
    %v10 = vld [vmem:[%s9] sm:$0x1]
    %11 = vrot.lane.b32.xlu0 %v10, 24
    %v12 = vpop.permute.xlu0 %11
    %vm13 = vcmask 261312
    %14 = vst.msk [vmem:[#allocation0] sm:$0x1] %vm13, %v12
    %s15 = scalar_lea.vmem [#allocation1], 2
    %v16 = vld [vmem:[%s15] sm:$0x1]
    %17 = vrot.lane.b32.xlu0 %v16, 16
    %v18 = vpop.permute.xlu0 %17
    %vm19 = vcmask 195712
    %20 = vst.msk [vmem:[#allocation0] sm:$0x1] %vm19, %v18
    %s21 = scalar_lea.vmem [#allocation1], 1
    %v22 = vld [vmem:[%s21] sm:$0x1]
    %23 = vrot.lane.b32.xlu0 %v22, 8
    %v24 = vpop.permute.xlu0 %23
    %vm25 = vcmask 130112
    %26 = vst.msk [vmem:[#allocation0] sm:$0x1] %vm25, %v24
    %s28 = sshllo.u32 0, 1
    %v30 = vld [vmem:[#allocation0] sm:%s28]
    %s31 = sshllo.u32 0, 1
    %32 = vst [vmem:[%s1] sm:%s31] %v30

// kernel: conv_recover_block_forward.1
$region0: #{conv_recover_block_forward.1}
  #allocation0 [shape = 'u32[]', space=smem, size = 0x4, offset = 0x4, fixed_abs, tag = 'smem constant byte address 0x4 - core index']
  #allocation1 [shape = 'u32[144,128]{1,0:T(1,128)}', space=vmem, size = 0x12000, scoped, tag = 'internal scratch']
  %s0 = inlined_call_operand.vmem [shape: bf16[2,10,10,4], index: 0, kind: input, shape index: {}]
  %s1 = inlined_call_operand.vmem [shape: bf16[128,32], index: 1, kind: input, shape index: {}]
  %s2 = inlined_call_operand.vmem [shape: f32[1,32], index: 2, kind: input, shape index: {}]
  %s3 = inlined_call_operand.vmem [shape: bf16[2,8,8,32], index: 3, kind: output, shape index: {}]
  %s4 = sld [smem:[#allocation0]]
  $region45: #{conv_recover_block_forward.1} parent=0
    _
  %s6 = ssub.s32 1, %s4
  %s7 = scalar_select 0, %s6, %s4
  loop: start=0, step=1, limit=4
  $region2: #{conv_recover_block_forward.1} parent=0 // loop_pre_header
    _
  $region3: #{conv_recover_block_forward.1} parent=0 // loop_header
    %s9 = sphi 0, %s13
    %p10 = scmp.ge.s32.totalorder %s9, 4
    %s16 = sphi 0, %s28
    %s17 = sphi 0, %s24
    %s18 = sphi 0, %s16
    %s19 = sphi 0, %s17
    %s20 = sphi 0, %s18
    %s21 = sphi 0, %s19
    %s31 = sphi 0, %s33
    %s34 = sphi 0, %s31
    %s35 = sphi 0, %s34
    %s51 = sphi 0, %s35
    %s55 = sphi 0, %s55
    %s57 = sphi 0, %s55
    %s58 = sphi 0, %s57
    %s72 = sphi 0, %s58
    %s76 = sphi 0, %s76
    %s78 = sphi 0, %s76
    %s79 = sphi 0, %s78
    %s93 = sphi 0, %s79
    %s101 = sphi 0, %s103
    %s104 = sphi 0, %s101
    %s105 = sphi 0, %s104
    %s121 = sphi 0, %s105
  $region4: #{conv_recover_block_forward.1} parent=0 // loop_header_branch
    %12 = sbr.rel (%p10) target = $region8
  $region5: #{conv_recover_block_forward.1} parent=0 // loop_body
    %s14 = ssub.s32 %s9, 1
    %s15 = ssub.s32 %s9, 2
    %s22 = sadd.s32 1, %s17
    %p23 = scmp.ge.s32.totalorder %s22, 1
    %s24 = scalar_select %p23, 0, %s22
    %s25 = sadd.s32 1, %s16
    %s26 = scalar_select %p23, %s25, %s16
    %p27 = scmp.ge.s32.totalorder %s26, 2
    %s28 = scalar_select %p27, 0, %s26
    %s29 = ssub.s32 %s16, %s28
    %p30 = scmp.eq.s32.totalorder %s29, 0
    %s32 = sadd.s32 %s31, 1
    %s33 = scalar_select %p30, %s31, %s32
    %p36 = pneg %p30
    %p37 = scmp.eq.s32.totalorder %s9, 1
    %p38 = por %p36, %p37
    %p39 = scmp.ne.s32.totalorder %s31, %s34
    %p40 = scmp.eq.s32.totalorder %s9, 0
    %p41 = por %p39, %p40
    %p42 = scmp.ne.s32.totalorder %s31, %s34
    %p43 = scmp.eq.s32.totalorder %s14, 1
    %p44 = por %p42, %p43
    %p45 = scmp.ne.s32.totalorder %s34, %s35
    %p46 = scmp.eq.s32.totalorder %s14, 0
    %p47 = por %p45, %p46
    %p48 = scmp.ne.s32.totalorder %s34, %s35
    %p49 = scmp.eq.s32.totalorder %s15, 1
    %p50 = por %p48, %p49
    %p52 = scmp.ne.s32.totalorder %s35, %s51
    %p53 = scmp.eq.s32.totalorder %s15, 0
    %p54 = por %p52, %p53
    %s56 = sadd.s32 %s55, 1
    %p59 = scmp.eq.s32.totalorder %s9, 1
    %p60 = scmp.ne.s32.totalorder %s55, %s57
    %p61 = scmp.eq.s32.totalorder %s9, 0
    %p62 = por %p60, %p61
    %p63 = scmp.ne.s32.totalorder %s55, %s57
    %p64 = scmp.eq.s32.totalorder %s14, 1
    %p65 = por %p63, %p64
    %p66 = scmp.ne.s32.totalorder %s57, %s58
    %p67 = scmp.eq.s32.totalorder %s14, 0
    %p68 = por %p66, %p67
    %p69 = scmp.ne.s32.totalorder %s57, %s58
    %p70 = scmp.eq.s32.totalorder %s15, 1
    %p71 = por %p69, %p70
    %p73 = scmp.ne.s32.totalorder %s58, %s72
    %p74 = scmp.eq.s32.totalorder %s15, 0
    %p75 = por %p73, %p74
    %s77 = sadd.s32 %s76, 1
    %p80 = scmp.eq.s32.totalorder %s9, 1
    %p81 = scmp.ne.s32.totalorder %s76, %s78
    %p82 = scmp.eq.s32.totalorder %s9, 0
    %p83 = por %p81, %p82
    %p84 = scmp.ne.s32.totalorder %s76, %s78
    %p85 = scmp.eq.s32.totalorder %s14, 1
    %p86 = por %p84, %p85
    %p87 = scmp.ne.s32.totalorder %s78, %s79
    %p88 = scmp.eq.s32.totalorder %s14, 0
    %p89 = por %p87, %p88
    %p90 = scmp.ne.s32.totalorder %s78, %s79
    %p91 = scmp.eq.s32.totalorder %s15, 1
    %p92 = por %p90, %p91
    %p94 = scmp.ne.s32.totalorder %s79, %s93
    %p95 = scmp.eq.s32.totalorder %s15, 0
    %p96 = por %p94, %p95
    %s97 = ssub.s32 %s16, %s28
    %s98 = ssub.s32 %s17, %s24
    %s99 = sor.u32 %s97, %s98
    %p100 = scmp.eq.s32.totalorder %s99, 0
    %s102 = sadd.s32 %s101, 1
    %s103 = scalar_select %p100, %s101, %s102
    %p106 = pneg %p100
    %p107 = scmp.eq.s32.totalorder %s9, 1
    %p108 = por %p106, %p107
    %p109 = scmp.ne.s32.totalorder %s101, %s104
    %p110 = scmp.eq.s32.totalorder %s9, 0
    %p111 = por %p109, %p110
    %p112 = scmp.ne.s32.totalorder %s101, %s104
    %p113 = scmp.eq.s32.totalorder %s14, 1
    %p114 = por %p112, %p113
    %p115 = scmp.ne.s32.totalorder %s104, %s105
    %p116 = scmp.eq.s32.totalorder %s14, 0
    %p117 = por %p115, %p116
    %p118 = scmp.ne.s32.totalorder %s104, %s105
    %p119 = scmp.eq.s32.totalorder %s15, 1
    %p120 = por %p118, %p119
    %p122 = scmp.ne.s32.totalorder %s105, %s121
    %p123 = scmp.eq.s32.totalorder %s15, 0
    %p124 = por %p122, %p123
    %p125 = scmp.le.s32.totalorder 1, %s9
    %p126 = scmp.lt.s32.totalorder %s9, 3
    %p127 = pnand %p125, %p126
    %p128 = pneg %p127
    // Predicated region
    $region9: #{conv_recover_block_forward.1} parent=5 // pred_check
      _
    $region10: #{conv_recover_block_forward.1} parent=5 // pred_check_branch
      %130 = sbr.rel (%p127) target = $region12
    $region11: #{conv_recover_block_forward.1} parent=5 // pred_region
      %s131 = ssub.s32 %s9, 1
      // Predicated region
      $region13: #{conv_recover_block_forward.1} parent=11 // pred_check
        %p132 = pneg %p68
      $region14: #{conv_recover_block_forward.1} parent=11 // pred_check_branch
        %134 = sbr.rel (%p132) target = $region16
      $region15: #{conv_recover_block_forward.1} parent=11 // pred_region
        _
      $region16: #{conv_recover_block_forward.1} parent=11 // pred_fallthru
        _
      // Predicated region
      $region17: #{conv_recover_block_forward.1} parent=11 // pred_check
        %p135 = pneg %p89
      $region18: #{conv_recover_block_forward.1} parent=11 // pred_check_branch
        %137 = sbr.rel (%p135) target = $region20
      $region19: #{conv_recover_block_forward.1} parent=11 // pred_region
        _
      $region20: #{conv_recover_block_forward.1} parent=11 // pred_fallthru
        _
    $region12: #{conv_recover_block_forward.1} parent=5 // pred_fallthru
      _
    %p138 = scmp.lt.s32.totalorder %s9, 2
    // Predicated region
    $region21: #{conv_recover_block_forward.1} parent=5 // pred_check
      %p139 = pneg %p138
    $region22: #{conv_recover_block_forward.1} parent=5 // pred_check_branch
      %141 = sbr.rel (%p139) target = $region24
    $region23: #{conv_recover_block_forward.1} parent=5 // pred_region
      // Predicated region
      $region25: #{conv_recover_block_forward.1} parent=23 // pred_check
        %p142 = pneg %p41
      $region26: #{conv_recover_block_forward.1} parent=23 // pred_check_branch
        %144 = sbr.rel (%p142) target = $region28
      $region27: #{conv_recover_block_forward.1} parent=23 // pred_region
        %p145 = scmp.lt.s32.totalorder %s16, 1
        %s146 = scalar_select %p145, %s16, 1
        %s147 = smul.addr %s146, 20
        %s148 = smul.addr %s147, 4
        %s149 = scalar_lea.vmem %s0, %s148
      $region28: #{conv_recover_block_forward.1} parent=23 // pred_fallthru
        _
    $region24: #{conv_recover_block_forward.1} parent=5 // pred_fallthru
      _
    %p150 = scmp.le.s32.totalorder 1, %s9
    %p151 = scmp.lt.s32.totalorder %s9, 3
    %p152 = pnand %p150, %p151
    %p153 = pneg %p152
    // Predicated region
    $region29: #{conv_recover_block_forward.1} parent=5 // pred_check
      _
    $region30: #{conv_recover_block_forward.1} parent=5 // pred_check_branch
      %155 = sbr.rel (%p152) target = $region32
    $region31: #{conv_recover_block_forward.1} parent=5 // pred_region
      %s156 = ssub.s32 %s9, 1
      %p157 = scmp.lt.s32.totalorder %s18, 1
      %s158 = scalar_select %p157, %s18, 1
      %s159 = smul.addr %s158, 20
      %s160 = smul.addr %s159, 4
      %s161 = scalar_lea.vmem %s0, %s160
      %p162 = pneg %p47
      %p163 = pneg %p44
      %p164 = pneg %p68
      %p165 = pneg %p65
      %p166 = pneg %p89
      %p167 = pneg %p86
      %p168 = pneg %p117
      %p169 = pneg %p114
      %s170 = smul.u32 8, %s19
      %p171 = scmp.lt.s32.totalorder %s18, 1
      %s172 = scalar_select %p171, %s18, 1
      %p173 = scmp.lt.s32.totalorder %s170, 7
      %s174 = scalar_select %p173, %s170, 7
      %s175 = smul.addr %s172, 8
      %s176 = sadd.s32 %s174, %s175
      %s177 = smul.addr %s176, 4
      %s178 = scalar_lea.vmem %s3, %s177
      %p179 = scmp.lt.s32.totalorder %s18, 1
      %s180 = scalar_select %p179, %s18, 1
      %s181 = smul.addr %s180, 20
      %s182 = smul.addr %s181, 4
      %s183 = scalar_lea.vmem %s0, %s182
      %s184 = smul.u32 8, %s19
      %p185 = scmp.lt.s32.totalorder %s18, 1
      %s186 = scalar_select %p185, %s18, 1
      %p187 = scmp.lt.s32.totalorder %s184, 7
      %s188 = scalar_select %p187, %s184, 7
      %s189 = smul.addr %s186, 8
      %s190 = sadd.s32 %s188, %s189
      %s191 = smul.addr %s190, 4
      %s192 = scalar_lea.vmem %s3, %s191
      %s193 = smul.u32 8, %s19
      %s195 = smul.u32 %s19, 8
      %s196 = smul.u32 %s195, 2
      %s197 = smul.addr %s196, 4
      %s198 = scalar_lea.vmem %s183, %s197
      %v199 = vld [vmem:[%s198] sm:$0xf]
      %v200 = vld [vmem:[%s198 + $0x4] sm:$0x1]
      %v201 = vld [vmem:[%s198 + $0x8] sm:$0xf]
      %v202 = vld [vmem:[%s198 + $0xc] sm:$0x1]
      %v203 = vld [vmem:[%s198 + $0x10] sm:$0xf]
      %v204 = vld [vmem:[%s198 + $0x14] sm:$0x1]
      %v205 = vld [vmem:[%s198 + $0x18] sm:$0xf]
      %v206 = vld [vmem:[%s198 + $0x1c] sm:$0x1]
      %v207 = vld [vmem:[%s198 + $0x20] sm:$0xf]
      %v208 = vld [vmem:[%s198 + $0x24] sm:$0x1]
      %v209 = vld [vmem:[%s198 + $0x28] sm:$0xf]
      %v210 = vld [vmem:[%s198 + $0x2c] sm:$0x1]
      %v211 = vld [vmem:[%s198 + $0x30] sm:$0xf]
      %v212 = vld [vmem:[%s198 + $0x34] sm:$0x1]
      %v213 = vld [vmem:[%s198 + $0x38] sm:$0xf]
      %v214 = vld [vmem:[%s198 + $0x3c] sm:$0x1]
      %s215 = sadd.s32 %s195, 1
      %s216 = smul.u32 %s215, 2
      %s217 = smul.addr %s216, 4
      %s218 = scalar_lea.vmem %s183, %s217
      %v219 = vld [vmem:[%s218] sm:$0xf]
      %v220 = vld [vmem:[%s218 + $0x4] sm:$0x1]
      %v221 = vld [vmem:[%s218 + $0x8] sm:$0xf]
      %v222 = vld [vmem:[%s218 + $0xc] sm:$0x1]
      %v223 = vld [vmem:[%s218 + $0x10] sm:$0xf]
      %v224 = vld [vmem:[%s218 + $0x14] sm:$0x1]
      %v225 = vld [vmem:[%s218 + $0x18] sm:$0xf]
      %v226 = vld [vmem:[%s218 + $0x1c] sm:$0x1]
      %v227 = vld [vmem:[%s218 + $0x20] sm:$0xf]
      %v228 = vld [vmem:[%s218 + $0x24] sm:$0x1]
      %v229 = vld [vmem:[%s218 + $0x28] sm:$0xf]
      %v230 = vld [vmem:[%s218 + $0x2c] sm:$0x1]
      %v231 = vld [vmem:[%s218 + $0x30] sm:$0xf]
      %v232 = vld [vmem:[%s218 + $0x34] sm:$0x1]
      %v233 = vld [vmem:[%s218 + $0x38] sm:$0xf]
      %v234 = vld [vmem:[%s218 + $0x3c] sm:$0x1]
      %s235 = sadd.s32 %s195, 2
      %s236 = smul.u32 %s235, 2
      %s237 = smul.addr %s236, 4
      %s238 = scalar_lea.vmem %s183, %s237
      %v239 = vld [vmem:[%s238] sm:$0xf]
      %v240 = vld [vmem:[%s238 + $0x4] sm:$0x1]
      %v241 = vld [vmem:[%s238 + $0x8] sm:$0xf]
      %v242 = vld [vmem:[%s238 + $0xc] sm:$0x1]
      %v243 = vld [vmem:[%s238 + $0x10] sm:$0xf]
      %v244 = vld [vmem:[%s238 + $0x14] sm:$0x1]
      %v245 = vld [vmem:[%s238 + $0x18] sm:$0xf]
      %v246 = vld [vmem:[%s238 + $0x1c] sm:$0x1]
      %v247 = vld [vmem:[%s238 + $0x20] sm:$0xf]
      %v248 = vld [vmem:[%s238 + $0x24] sm:$0x1]
      %v249 = vld [vmem:[%s238 + $0x28] sm:$0xf]
      %v250 = vld [vmem:[%s238 + $0x2c] sm:$0x1]
      %v251 = vld [vmem:[%s238 + $0x30] sm:$0xf]
      %v252 = vld [vmem:[%s238 + $0x34] sm:$0x1]
      %v253 = vld [vmem:[%s238 + $0x38] sm:$0xf]
      %v254 = vld [vmem:[%s238 + $0x3c] sm:$0x1]
      %v271 = vunpack.c.l.b16 %v199
      %v272 = vunpack.c.l.b16 %v200
      %v273 = vunpack.c.l.b16 %v201
      %v274 = vunpack.c.l.b16 %v202
      %v275 = vunpack.c.l.b16 %v203
      %v276 = vunpack.c.l.b16 %v204
      %v277 = vunpack.c.l.b16 %v205
      %v278 = vunpack.c.l.b16 %v206
      %v279 = vunpack.c.l.b16 %v207
      %v280 = vunpack.c.l.b16 %v208
      %v281 = vunpack.c.l.b16 %v209
      %v282 = vunpack.c.l.b16 %v210
      %v283 = vunpack.c.l.b16 %v211
      %v284 = vunpack.c.l.b16 %v212
      %v285 = vunpack.c.l.b16 %v213
      %v286 = vunpack.c.l.b16 %v214
      %v287 = vpack.c.b16 %v272, %v271
      %v288 = vpack.c.b16 %v274, %v273
      %v289 = vpack.c.b16 %v276, %v275
      %v290 = vpack.c.b16 %v278, %v277
      %v291 = vpack.c.b16 %v280, %v279
      %v292 = vpack.c.b16 %v282, %v281
      %v293 = vpack.c.b16 %v284, %v283
      %v294 = vpack.c.b16 %v286, %v285
      %v296 = vshrl.u32 %v287, 16
      %v298 = vshll.u32 %v287, 16
      %v300 = vrot.slane %v298, 1
      %v301 = vor.u32 %v296, %v300
      %v303 = vshrl.u32 %v288, 16
      %v305 = vshll.u32 %v288, 16
      %v307 = vrot.slane %v305, 1
      %v308 = vor.u32 %v303, %v307
      %v310 = vshrl.u32 %v289, 16
      %v312 = vshll.u32 %v289, 16
      %v314 = vrot.slane %v312, 1
      %v315 = vor.u32 %v310, %v314
      %v317 = vshrl.u32 %v290, 16
      %v319 = vshll.u32 %v290, 16
      %v321 = vrot.slane %v319, 1
      %v322 = vor.u32 %v317, %v321
      %v324 = vshrl.u32 %v291, 16
      %v326 = vshll.u32 %v291, 16
      %v328 = vrot.slane %v326, 1
      %v329 = vor.u32 %v324, %v328
      %v331 = vshrl.u32 %v292, 16
      %v333 = vshll.u32 %v292, 16
      %v335 = vrot.slane %v333, 1
      %v336 = vor.u32 %v331, %v335
      %v338 = vshrl.u32 %v293, 16
      %v340 = vshll.u32 %v293, 16
      %v342 = vrot.slane %v340, 1
      %v343 = vor.u32 %v338, %v342
      %v345 = vshrl.u32 %v294, 16
      %v347 = vshll.u32 %v294, 16
      %v349 = vrot.slane %v347, 1
      %v350 = vor.u32 %v345, %v349
      %351 = vrot.lane.b32.xlu0 %v301, 4
      %v352 = vpop.permute.xlu0 %351
      %353 = vrot.lane.b32.xlu0 %v308, 4
      %v354 = vpop.permute.xlu0 %353
      %355 = vrot.lane.b32.xlu0 %v315, 4
      %v356 = vpop.permute.xlu0 %355
      %357 = vrot.lane.b32.xlu0 %v322, 4
      %v358 = vpop.permute.xlu0 %357
      %359 = vrot.lane.b32.xlu0 %v329, 4
      %v360 = vpop.permute.xlu0 %359
      %361 = vrot.lane.b32.xlu0 %v336, 4
      %v362 = vpop.permute.xlu0 %361
      %363 = vrot.lane.b32.xlu0 %v343, 4
      %v364 = vpop.permute.xlu0 %363
      %365 = vrot.lane.b32.xlu0 %v350, 4
      %v366 = vpop.permute.xlu0 %365
      %v367 = vrot.slane %v287, 1
      %v368 = vrot.slane %v288, 1
      %v369 = vrot.slane %v289, 1
      %v370 = vrot.slane %v290, 1
      %v371 = vrot.slane %v291, 1
      %v372 = vrot.slane %v292, 1
      %v373 = vrot.slane %v293, 1
      %v374 = vrot.slane %v294, 1
      %375 = vrot.lane.b32.xlu0 %v367, 8
      %v376 = vpop.permute.xlu0 %375
      %377 = vrot.lane.b32.xlu0 %v368, 8
      %v378 = vpop.permute.xlu0 %377
      %379 = vrot.lane.b32.xlu0 %v369, 8
      %v380 = vpop.permute.xlu0 %379
      %381 = vrot.lane.b32.xlu0 %v370, 8
      %v382 = vpop.permute.xlu0 %381
      %383 = vrot.lane.b32.xlu0 %v371, 8
      %v384 = vpop.permute.xlu0 %383
      %385 = vrot.lane.b32.xlu0 %v372, 8
      %v386 = vpop.permute.xlu0 %385
      %387 = vrot.lane.b32.xlu0 %v373, 8
      %v388 = vpop.permute.xlu0 %387
      %389 = vrot.lane.b32.xlu0 %v374, 8
      %v390 = vpop.permute.xlu0 %389
      %v399 = vunpack.c.l.b16 %v219
      %v400 = vunpack.c.l.b16 %v221
      %v401 = vunpack.c.l.b16 %v223
      %v402 = vunpack.c.l.b16 %v225
      %v403 = vunpack.c.l.b16 %v227
      %v404 = vunpack.c.l.b16 %v229
      %v405 = vunpack.c.l.b16 %v231
      %v406 = vunpack.c.l.b16 %v233
      %v407 = vpack.c.b16 %v399, %v399
      %v408 = vpack.c.b16 %v400, %v400
      %v409 = vpack.c.b16 %v401, %v401
      %v410 = vpack.c.b16 %v402, %v402
      %v411 = vpack.c.b16 %v403, %v403
      %v412 = vpack.c.b16 %v404, %v404
      %v413 = vpack.c.b16 %v405, %v405
      %v414 = vpack.c.b16 %v406, %v406
      %415 = vrot.lane.b32.xlu0 %v407, 12
      %v416 = vpop.permute.xlu0 %415
      %417 = vrot.lane.b32.xlu0 %v408, 12
      %v418 = vpop.permute.xlu0 %417
      %419 = vrot.lane.b32.xlu0 %v409, 12
      %v420 = vpop.permute.xlu0 %419
      %421 = vrot.lane.b32.xlu0 %v410, 12
      %v422 = vpop.permute.xlu0 %421
      %423 = vrot.lane.b32.xlu0 %v411, 12
      %v424 = vpop.permute.xlu0 %423
      %425 = vrot.lane.b32.xlu0 %v412, 12
      %v426 = vpop.permute.xlu0 %425
      %427 = vrot.lane.b32.xlu0 %v413, 12
      %v428 = vpop.permute.xlu0 %427
      %429 = vrot.lane.b32.xlu0 %v414, 12
      %v430 = vpop.permute.xlu0 %429
      %v439 = vunpack.c.l.b16 %v220
      %v440 = vunpack.c.l.b16 %v222
      %v441 = vunpack.c.l.b16 %v224
      %v442 = vunpack.c.l.b16 %v226
      %v443 = vunpack.c.l.b16 %v228
      %v444 = vunpack.c.l.b16 %v230
      %v445 = vunpack.c.l.b16 %v232
      %v446 = vunpack.c.l.b16 %v234
      %v447 = vpack.c.b16 %v439, %v399
      %v448 = vpack.c.b16 %v440, %v400
      %v449 = vpack.c.b16 %v441, %v401
      %v450 = vpack.c.b16 %v442, %v402
      %v451 = vpack.c.b16 %v443, %v403
      %v452 = vpack.c.b16 %v444, %v404
      %v453 = vpack.c.b16 %v445, %v405
      %v454 = vpack.c.b16 %v446, %v406
      %v456 = vshrl.u32 %v447, 16
      %v458 = vshll.u32 %v447, 16
      %v460 = vrot.slane %v458, 1
      %v461 = vor.u32 %v456, %v460
      %v463 = vshrl.u32 %v448, 16
      %v465 = vshll.u32 %v448, 16
      %v467 = vrot.slane %v465, 1
      %v468 = vor.u32 %v463, %v467
      %v470 = vshrl.u32 %v449, 16
      %v472 = vshll.u32 %v449, 16
      %v474 = vrot.slane %v472, 1
      %v475 = vor.u32 %v470, %v474
      %v477 = vshrl.u32 %v450, 16
      %v479 = vshll.u32 %v450, 16
      %v481 = vrot.slane %v479, 1
      %v482 = vor.u32 %v477, %v481
      %v484 = vshrl.u32 %v451, 16
      %v486 = vshll.u32 %v451, 16
      %v488 = vrot.slane %v486, 1
      %v489 = vor.u32 %v484, %v488
      %v491 = vshrl.u32 %v452, 16
      %v493 = vshll.u32 %v452, 16
      %v495 = vrot.slane %v493, 1
      %v496 = vor.u32 %v491, %v495
      %v498 = vshrl.u32 %v453, 16
      %v500 = vshll.u32 %v453, 16
      %v502 = vrot.slane %v500, 1
      %v503 = vor.u32 %v498, %v502
      %v505 = vshrl.u32 %v454, 16
      %v507 = vshll.u32 %v454, 16
      %v509 = vrot.slane %v507, 1
      %v510 = vor.u32 %v505, %v509
      %511 = vrot.lane.b32.xlu0 %v461, 16
      %v512 = vpop.permute.xlu0 %511
      %513 = vrot.lane.b32.xlu0 %v468, 16
      %v514 = vpop.permute.xlu0 %513
      %515 = vrot.lane.b32.xlu0 %v475, 16
      %v516 = vpop.permute.xlu0 %515
      %517 = vrot.lane.b32.xlu0 %v482, 16
      %v518 = vpop.permute.xlu0 %517
      %519 = vrot.lane.b32.xlu0 %v489, 16
      %v520 = vpop.permute.xlu0 %519
      %521 = vrot.lane.b32.xlu0 %v496, 16
      %v522 = vpop.permute.xlu0 %521
      %523 = vrot.lane.b32.xlu0 %v503, 16
      %v524 = vpop.permute.xlu0 %523
      %525 = vrot.lane.b32.xlu0 %v510, 16
      %v526 = vpop.permute.xlu0 %525
      %v527 = vrot.slane %v447, 1
      %v528 = vrot.slane %v448, 1
      %v529 = vrot.slane %v449, 1
      %v530 = vrot.slane %v450, 1
      %v531 = vrot.slane %v451, 1
      %v532 = vrot.slane %v452, 1
      %v533 = vrot.slane %v453, 1
      %v534 = vrot.slane %v454, 1
      %535 = vrot.lane.b32.xlu0 %v527, 20
      %v536 = vpop.permute.xlu0 %535
      %537 = vrot.lane.b32.xlu0 %v528, 20
      %v538 = vpop.permute.xlu0 %537
      %539 = vrot.lane.b32.xlu0 %v529, 20
      %v540 = vpop.permute.xlu0 %539
      %541 = vrot.lane.b32.xlu0 %v530, 20
      %v542 = vpop.permute.xlu0 %541
      %543 = vrot.lane.b32.xlu0 %v531, 20
      %v544 = vpop.permute.xlu0 %543
      %545 = vrot.lane.b32.xlu0 %v532, 20
      %v546 = vpop.permute.xlu0 %545
      %547 = vrot.lane.b32.xlu0 %v533, 20
      %v548 = vpop.permute.xlu0 %547
      %549 = vrot.lane.b32.xlu0 %v534, 20
      %v550 = vpop.permute.xlu0 %549
      %v559 = vunpack.c.l.b16 %v239
      %v560 = vunpack.c.l.b16 %v241
      %v561 = vunpack.c.l.b16 %v243
      %v562 = vunpack.c.l.b16 %v245
      %v563 = vunpack.c.l.b16 %v247
      %v564 = vunpack.c.l.b16 %v249
      %v565 = vunpack.c.l.b16 %v251
      %v566 = vunpack.c.l.b16 %v253
      %v567 = vpack.c.b16 %v559, %v559
      %v568 = vpack.c.b16 %v560, %v560
      %v569 = vpack.c.b16 %v561, %v561
      %v570 = vpack.c.b16 %v562, %v562
      %v571 = vpack.c.b16 %v563, %v563
      %v572 = vpack.c.b16 %v564, %v564
      %v573 = vpack.c.b16 %v565, %v565
      %v574 = vpack.c.b16 %v566, %v566
      %575 = vrot.lane.b32.xlu0 %v567, 24
      %v576 = vpop.permute.xlu0 %575
      %577 = vrot.lane.b32.xlu0 %v568, 24
      %v578 = vpop.permute.xlu0 %577
      %579 = vrot.lane.b32.xlu0 %v569, 24
      %v580 = vpop.permute.xlu0 %579
      %581 = vrot.lane.b32.xlu0 %v570, 24
      %v582 = vpop.permute.xlu0 %581
      %583 = vrot.lane.b32.xlu0 %v571, 24
      %v584 = vpop.permute.xlu0 %583
      %585 = vrot.lane.b32.xlu0 %v572, 24
      %v586 = vpop.permute.xlu0 %585
      %587 = vrot.lane.b32.xlu0 %v573, 24
      %v588 = vpop.permute.xlu0 %587
      %589 = vrot.lane.b32.xlu0 %v574, 24
      %v590 = vpop.permute.xlu0 %589
      %v599 = vunpack.c.l.b16 %v240
      %v600 = vunpack.c.l.b16 %v242
      %v601 = vunpack.c.l.b16 %v244
      %v602 = vunpack.c.l.b16 %v246
      %v603 = vunpack.c.l.b16 %v248
      %v604 = vunpack.c.l.b16 %v250
      %v605 = vunpack.c.l.b16 %v252
      %v606 = vunpack.c.l.b16 %v254
      %v607 = vpack.c.b16 %v599, %v559
      %v608 = vpack.c.b16 %v600, %v560
      %v609 = vpack.c.b16 %v601, %v561
      %v610 = vpack.c.b16 %v602, %v562
      %v611 = vpack.c.b16 %v603, %v563
      %v612 = vpack.c.b16 %v604, %v564
      %v613 = vpack.c.b16 %v605, %v565
      %v614 = vpack.c.b16 %v606, %v566
      %v616 = vshrl.u32 %v607, 16
      %v618 = vshll.u32 %v607, 16
      %v620 = vrot.slane %v618, 1
      %v621 = vor.u32 %v616, %v620
      %v623 = vshrl.u32 %v608, 16
      %v625 = vshll.u32 %v608, 16
      %v627 = vrot.slane %v625, 1
      %v628 = vor.u32 %v623, %v627
      %v630 = vshrl.u32 %v609, 16
      %v632 = vshll.u32 %v609, 16
      %v634 = vrot.slane %v632, 1
      %v635 = vor.u32 %v630, %v634
      %v637 = vshrl.u32 %v610, 16
      %v639 = vshll.u32 %v610, 16
      %v641 = vrot.slane %v639, 1
      %v642 = vor.u32 %v637, %v641
      %v644 = vshrl.u32 %v611, 16
      %v646 = vshll.u32 %v611, 16
      %v648 = vrot.slane %v646, 1
      %v649 = vor.u32 %v644, %v648
      %v651 = vshrl.u32 %v612, 16
      %v653 = vshll.u32 %v612, 16
      %v655 = vrot.slane %v653, 1
      %v656 = vor.u32 %v651, %v655
      %v658 = vshrl.u32 %v613, 16
      %v660 = vshll.u32 %v613, 16
      %v662 = vrot.slane %v660, 1
      %v663 = vor.u32 %v658, %v662
      %v665 = vshrl.u32 %v614, 16
      %v667 = vshll.u32 %v614, 16
      %v669 = vrot.slane %v667, 1
      %v670 = vor.u32 %v665, %v669
      %671 = vrot.lane.b32.xlu0 %v621, 28
      %v672 = vpop.permute.xlu0 %671
      %673 = vrot.lane.b32.xlu0 %v628, 28
      %v674 = vpop.permute.xlu0 %673
      %675 = vrot.lane.b32.xlu0 %v635, 28
      %v676 = vpop.permute.xlu0 %675
      %677 = vrot.lane.b32.xlu0 %v642, 28
      %v678 = vpop.permute.xlu0 %677
      %679 = vrot.lane.b32.xlu0 %v649, 28
      %v680 = vpop.permute.xlu0 %679
      %681 = vrot.lane.b32.xlu0 %v656, 28
      %v682 = vpop.permute.xlu0 %681
      %683 = vrot.lane.b32.xlu0 %v663, 28
      %v684 = vpop.permute.xlu0 %683
      %685 = vrot.lane.b32.xlu0 %v670, 28
      %v686 = vpop.permute.xlu0 %685
      %v687 = vrot.slane %v607, 1
      %v688 = vrot.slane %v608, 1
      %v689 = vrot.slane %v609, 1
      %v690 = vrot.slane %v610, 1
      %v691 = vrot.slane %v611, 1
      %v692 = vrot.slane %v612, 1
      %v693 = vrot.slane %v613, 1
      %v694 = vrot.slane %v614, 1
      %695 = vrot.lane.b32.xlu0 %v687, 32
      %v696 = vpop.permute.xlu0 %695
      %697 = vrot.lane.b32.xlu0 %v688, 32
      %v698 = vpop.permute.xlu0 %697
      %699 = vrot.lane.b32.xlu0 %v689, 32
      %v700 = vpop.permute.xlu0 %699
      %701 = vrot.lane.b32.xlu0 %v690, 32
      %v702 = vpop.permute.xlu0 %701
      %703 = vrot.lane.b32.xlu0 %v691, 32
      %v704 = vpop.permute.xlu0 %703
      %705 = vrot.lane.b32.xlu0 %v692, 32
      %v706 = vpop.permute.xlu0 %705
      %707 = vrot.lane.b32.xlu0 %v693, 32
      %v708 = vpop.permute.xlu0 %707
      %709 = vrot.lane.b32.xlu0 %v694, 32
      %v710 = vpop.permute.xlu0 %709
      %vm711 = vcmask 31744
      %v714 = vsel %vm711, %v199, %v352
      %v717 = vsel %vm711, %v201, %v354
      %v720 = vsel %vm711, %v203, %v356
      %v723 = vsel %vm711, %v205, %v358
      %v726 = vsel %vm711, %v207, %v360
      %v729 = vsel %vm711, %v209, %v362
      %v732 = vsel %vm711, %v211, %v364
      %v735 = vsel %vm711, %v213, %v366
      %vm736 = vcmask 64512
      %v738 = vsel %vm736, %v714, %v376
      %v740 = vsel %vm736, %v717, %v378
      %v742 = vsel %vm736, %v720, %v380
      %v744 = vsel %vm736, %v723, %v382
      %v746 = vsel %vm736, %v726, %v384
      %v748 = vsel %vm736, %v729, %v386
      %v750 = vsel %vm736, %v732, %v388
      %v752 = vsel %vm736, %v735, %v390
      %vm753 = vcmask 97280
      %v755 = vsel %vm753, %v738, %v416
      %v757 = vsel %vm753, %v740, %v418
      %v759 = vsel %vm753, %v742, %v420
      %v761 = vsel %vm753, %v744, %v422
      %v763 = vsel %vm753, %v746, %v424
      %v765 = vsel %vm753, %v748, %v426
      %v767 = vsel %vm753, %v750, %v428
      %v769 = vsel %vm753, %v752, %v430
      %vm770 = vcmask 130048
      %v772 = vsel %vm770, %v755, %v512
      %v774 = vsel %vm770, %v757, %v514
      %v776 = vsel %vm770, %v759, %v516
      %v778 = vsel %vm770, %v761, %v518
      %v780 = vsel %vm770, %v763, %v520
      %v782 = vsel %vm770, %v765, %v522
      %v784 = vsel %vm770, %v767, %v524
      %v786 = vsel %vm770, %v769, %v526
      %vm787 = vcmask 162816
      %v789 = vsel %vm787, %v772, %v536
      %v791 = vsel %vm787, %v774, %v538
      %v793 = vsel %vm787, %v776, %v540
      %v795 = vsel %vm787, %v778, %v542
      %v797 = vsel %vm787, %v780, %v544
      %v799 = vsel %vm787, %v782, %v546
      %v801 = vsel %vm787, %v784, %v548
      %v803 = vsel %vm787, %v786, %v550
      %vm804 = vcmask 195584
      %v806 = vsel %vm804, %v789, %v576
      %v808 = vsel %vm804, %v791, %v578
      %v810 = vsel %vm804, %v793, %v580
      %v812 = vsel %vm804, %v795, %v582
      %v814 = vsel %vm804, %v797, %v584
      %v816 = vsel %vm804, %v799, %v586
      %v818 = vsel %vm804, %v801, %v588
      %v820 = vsel %vm804, %v803, %v590
      %vm821 = vcmask 228352
      %v823 = vsel %vm821, %v806, %v672
      %v825 = vsel %vm821, %v808, %v674
      %v827 = vsel %vm821, %v810, %v676
      %v829 = vsel %vm821, %v812, %v678
      %v831 = vsel %vm821, %v814, %v680
      %v833 = vsel %vm821, %v816, %v682
      %v835 = vsel %vm821, %v818, %v684
      %v837 = vsel %vm821, %v820, %v686
      %vm838 = vcmask 261120
      %v840 = vsel %vm838, %v823, %v696
      %v842 = vsel %vm838, %v825, %v698
      %v844 = vsel %vm838, %v827, %v700
      %v846 = vsel %vm838, %v829, %v702
      %v848 = vsel %vm838, %v831, %v704
      %v850 = vsel %vm838, %v833, %v706
      %v852 = vsel %vm838, %v835, %v708
      %v854 = vsel %vm838, %v837, %v710
      %vm855 = vcmask 293888
      %v857 = vsel %vm855, %v840, 0
      %v858 = vsel %vm855, %v842, 0
      %v859 = vsel %vm855, %v844, 0
      %v860 = vsel %vm855, %v846, 0
      %v861 = vsel %vm855, %v848, 0
      %v862 = vsel %vm855, %v850, 0
      %v863 = vsel %vm855, %v852, 0
      %v864 = vsel %vm855, %v854, 0
      %v865 = vld [vmem:[%s1] sm:$0xf]
      %v866 = vld [vmem:[%s1 + $0x4] sm:$0xf]
      %v867 = vld [vmem:[%s1 + $0x8] sm:$0xf]
      %v868 = vld [vmem:[%s1 + $0xc] sm:$0xf]
      %v869 = vld [vmem:[%s1 + $0x10] sm:$0xf]
      %v870 = vld [vmem:[%s1 + $0x14] sm:$0xf]
      %v871 = vld [vmem:[%s1 + $0x18] sm:$0xf]
      %v872 = vld [vmem:[%s1 + $0x1c] sm:$0xf]
      %v873 = vld [vmem:[%s1 + $0x20] sm:$0xf]
      %v874 = vld [vmem:[%s1 + $0x24] sm:$0xf]
      %v875 = vld [vmem:[%s1 + $0x28] sm:$0xf]
      %v876 = vld [vmem:[%s1 + $0x2c] sm:$0xf]
      %v877 = vld [vmem:[%s1 + $0x30] sm:$0xf]
      %v878 = vld [vmem:[%s1 + $0x34] sm:$0xf]
      %v879 = vld [vmem:[%s1 + $0x38] sm:$0xf]
      %v880 = vld [vmem:[%s1 + $0x3c] sm:$0xf]
      %v881 = vld [vmem:[%s2] sm:$0x1]
      %v883 = vlaneseq
      %v884 = vshrl.u32 %v883, 7
      %v885 = vsub.s32 0, %v884
      %v886 = vrot.slane %v881, %v885
      %v896 = vunpack.c.l.b16 %v857
      %v897 = vunpack.c.l.b16 %v858
      %v898 = vunpack.c.l.b16 %v859
      %v899 = vunpack.c.l.b16 %v860
      %v900 = vunpack.c.l.b16 %v861
      %v901 = vunpack.c.l.b16 %v862
      %v902 = vunpack.c.l.b16 %v863
      %v903 = vunpack.c.l.b16 %v864
      %v904 = vpack.c.b16 %v897, %v896
      %v905 = vpack.c.b16 %v899, %v898
      %v906 = vpack.c.b16 %v901, %v900
      %v907 = vpack.c.b16 %v903, %v902
      %v928 = vunpack.c.l.b16 %v865
      %v929 = vunpack.c.l.b16 %v866
      %v930 = vunpack.c.l.b16 %v867
      %v931 = vunpack.c.l.b16 %v868
      %v932 = vunpack.c.l.b16 %v869
      %v933 = vunpack.c.l.b16 %v870
      %v934 = vunpack.c.l.b16 %v871
      %v935 = vunpack.c.l.b16 %v872
      %v936 = vunpack.c.l.b16 %v873
      %v937 = vunpack.c.l.b16 %v874
      %v938 = vunpack.c.l.b16 %v875
      %v939 = vunpack.c.l.b16 %v876
      %v940 = vunpack.c.l.b16 %v877
      %v941 = vunpack.c.l.b16 %v878
      %v942 = vunpack.c.l.b16 %v879
      %v943 = vunpack.c.l.b16 %v880
      %v944 = vpack.c.b16 %v929, %v928
      %v945 = vpack.c.b16 %v931, %v930
      %v946 = vpack.c.b16 %v933, %v932
      %v947 = vpack.c.b16 %v935, %v934
      %v948 = vpack.c.b16 %v937, %v936
      %v949 = vpack.c.b16 %v939, %v938
      %v950 = vpack.c.b16 %v941, %v940
      %v951 = vpack.c.b16 %v943, %v942
      %960 = vmatprep.subr.bf16.mxu0 0
      %961 = vmatpush1.bf16.msra.mxu0 %v944
      %962 = vmatprep.subr.bf16.mxu0 0
      %963 = vmatpush1.bf16.msra.mxu0 %v945
      %964 = vmatprep.subr.bf16.mxu0 0
      %965 = vmatpush1.bf16.msra.mxu0 %v946
      %966 = vmatprep.subr.bf16.mxu0 0
      %967 = vmatpush1.bf16.msra.mxu0 %v947
      %968 = vmatprep.subr.bf16.mxu0 0
      %969 = vmatpush1.bf16.msra.mxu0 %v948
      %970 = vmatprep.subr.bf16.mxu0 0
      %971 = vmatpush1.bf16.msra.mxu0 %v949
      %972 = vmatprep.subr.bf16.mxu0 0
      %973 = vmatpush1.bf16.msra.mxu0 %v950
      %974 = vmatprep.subr.bf16.mxu0 0
      %975 = vmatpush1.bf16.msra.mxu0 %v951
      %976 = vmatprep.subr.bf16.mxu0 0
      %977 = vmatpush1.bf16.msra.mxu0 0
      %978 = vmatprep.subr.bf16.mxu0 0
      %979 = vmatpush1.bf16.msra.mxu0 0
      %980 = vmatprep.subr.bf16.mxu0 0
      %981 = vmatpush1.bf16.msra.mxu0 0
      %982 = vmatprep.subr.bf16.mxu0 0
      %983 = vmatpush1.bf16.msra.mxu0 0
      %984 = vmatprep.subr.bf16.mxu0 0
      %985 = vmatpush1.bf16.msra.mxu0 0
      %986 = vmatprep.subr.bf16.mxu0 0
      %987 = vmatpush1.bf16.msra.mxu0 0
      %988 = vmatprep.subr.bf16.mxu0 0
      %989 = vmatpush1.bf16.msra.mxu0 0
      %990 = vmatprep.subr.bf16.mxu0 0
      %991 = vmatpush1.bf16.msra.mxu0 0
      %992 = vmatprep.mubr.bf16.mxu0 0
      %993 = vmatmul.mubr.bf16.gmra.mrb[0].mxu0 %v904
      %v994 = vpop.f32.mrb[0].mxu0
      %v995 = vadd.f32 %v886, %v994
      %v996 = vpop.f32.mrb[0].mxu0
      %v997 = vpop.f32.mrb[0].mxu0
      %v998 = vadd.f32 %v886, %v997
      %v999 = vpop.f32.mrb[0].mxu0
      %1000 = vmatprep.mubr.bf16.mxu0 0
      %1001 = vmatmul.mubr.bf16.gmra.mrb[0].mxu0 %v905
      %v1002 = vpop.f32.mrb[0].mxu0
      %v1003 = vadd.f32 %v886, %v1002
      %v1004 = vpop.f32.mrb[0].mxu0
      %v1005 = vpop.f32.mrb[0].mxu0
      %v1006 = vadd.f32 %v886, %v1005
      %v1007 = vpop.f32.mrb[0].mxu0
      %1008 = vmatprep.mubr.bf16.mxu0 0
      %1009 = vmatmul.mubr.bf16.gmra.mrb[0].mxu0 %v906
      %v1010 = vpop.f32.mrb[0].mxu0
      %v1011 = vadd.f32 %v886, %v1010
      %v1012 = vpop.f32.mrb[0].mxu0
      %v1013 = vpop.f32.mrb[0].mxu0
      %v1014 = vadd.f32 %v886, %v1013
      %v1015 = vpop.f32.mrb[0].mxu0
      %1016 = vmatprep.mubr.bf16.mxu0 0
      %1017 = vmatmul.mubr.bf16.gmra.mrb[0].mxu0 %v907
      %v1018 = vpop.f32.mrb[0].mxu0
      %v1019 = vadd.f32 %v886, %v1018
      %v1020 = vpop.f32.mrb[0].mxu0
      %v1021 = vpop.f32.mrb[0].mxu0
      %v1022 = vadd.f32 %v886, %v1021
      %v1023 = vpop.f32.mrb[0].mxu0
      %1024 = vdwg.mxu0
      %v1025 = vand.u32 2147483647, %v995
      %vm1026 = vcmp.le.f32.partialorder %v1025, 0.7853982
      %vm1027 = vcmp.lt.s32.totalorder %v995, 0
      %v1028 = vand.u32 %v995, 2139095040
      %v1029 = vshrl.u32 %v1028, 23
      %v1030 = vsub.s32 %v1029, 127
      %v1031 = vand.u32 2147483647, %v995
      %v1032 = vand.u32 %v1031, 8388607
      %v1033 = vor.u32 %v1032, 8388608
      %v1034 = vsub.s32 0, %v1033
      %v1035 = vadd.s32 %v1030, 1
      %vm1036 = vcmp.gt.s32.totalorder %v1035, 0
      %v1037 = vsel %vm1036, %v1035, 0
      %v1038 = vshrl.u32 %v1037, 5
      %v1039 = vand.u32 %v1037, 31
      %v1040 = vsub.s32 32, %v1039
      %v1041 = vshrl.u32 683565275, %v1040
      %v1042 = vshll.u32 683565275, %v1039
      %v1043 = vshrl.u32 2475754826, %v1040
      %v1044 = vor.u32 %v1042, %v1043
      %v1045 = vshll.u32 2475754826, %v1039
      %v1046 = vshrl.u32 2131351028, %v1040
      %v1047 = vor.u32 %v1045, %v1046
      %v1048 = vshll.u32 2131351028, %v1039
      %v1049 = vshrl.u32 2102212464, %v1040
      %v1050 = vor.u32 %v1048, %v1049
      %v1051 = vshll.u32 2102212464, %v1039
      %v1052 = vshrl.u32 920167782, %v1040
      %v1053 = vor.u32 %v1051, %v1052
      %v1054 = vshll.u32 920167782, %v1039
      %v1055 = vshrl.u32 1326507024, %v1040
      %v1056 = vor.u32 %v1054, %v1055
      %vm1057 = vcmp.lt.s32.totalorder %v1038, 1
      %vm1058 = vcmp.lt.s32.totalorder %v1038, 2
      %vm1059 = vcmp.lt.s32.totalorder %v1038, 3
      %vm1060 = vcmp.lt.s32.totalorder %v1038, 4
      %v1061 = vsel %vm1057, %v1041, %v1044
      %v1062 = vsel %vm1060, %v1050, 2102212464
      %v1063 = vsel %vm1059, %v1047, %v1062
      %v1064 = vsel %vm1058, %v1061, %v1063
      %v1065 = vsel %vm1057, %v1044, %v1047
      %v1066 = vsel %vm1060, %v1053, 920167782
      %v1067 = vsel %vm1059, %v1050, %v1066
      %v1068 = vsel %vm1058, %v1065, %v1067
      %v1069 = vsel %vm1057, %v1047, %v1050
      %v1070 = vsel %vm1060, %v1056, 1326507024
      %v1071 = vsel %vm1059, %v1053, %v1070
      %v1072 = vsel %vm1058, %v1069, %v1071
      %v1073 = vshll.u32 %v1033, 8
      %v1074 = vmul.u32.u64.compose %v1073, %v1072
      %v1075 = vextract.low.u32 %v1074
      %v1076 = vextract.high.u32 %v1074
      %v1077 = vmul.u32.u64.compose %v1073, %v1068
      %v1078 = vextract.low.u32 %v1077
      %v1079 = vextract.high.u32 %v1077
      %v1080 = vmul.u32 %v1073, %v1064
      %v1081 = vadd.s32 %v1076, %v1078
      %vm1082 = vc.u32 %v1076, %v1078
      %v1083 = vadd.s32 %v1079, 1
      %v1084 = vsel %vm1082, %v1083, %v1079
      %v1085 = vadd.s32 %v1080, %v1084
      %v1086 = vadd.s32 %v1085, 536870912
      %v1087 = vshrl.u32 %v1086, 30
      %v1088 = vshll.u32 %v1087, 30
      %v1089 = vsub.s32 %v1085, %v1088
      %vm1090 = vcmp.lt.s32.totalorder %v1089, 0
      %v1091 = vsub.s32 0, %v1089
      %v1092 = vsel %vm1090, %v1091, %v1089
      %v1093 = vclz %v1092
      %v1094 = vsub.s32 %v1093, 2
      %vm1095 = vcmp.gt.s32.totalorder 0, %v1094
      %v1096 = vsel %vm1095, 0, %v1094
      %v1097 = vsub.s32 32, %v1096
      %v1098 = vshll.u32 %v1089, %v1096
      %v1099 = vshrl.u32 %v1081, %v1097
      %v1100 = vor.u32 %v1098, %v1099
      %v1101 = vsub.s32 4294967266, %v1096
      %v1102 = vadd.s32 %v1101, 127
      %v1103 = vshll.u32 %v1102, 23
      %v1104 = vor.u32 4788187, %v1103
      %v1105 = vand.u32 2147483647, %v1104
      %v1107 = vcvt.s32.f32 %v1100
      %v1108 = vmul.f32 %v1107, %v1105
      %v1109 = vxor.u32 %v1108, 2147483648
      %v1110 = vsel %vm1027, %v1109, %v1108
      %v1111 = vsub.s32 4, %v1087
      %v1112 = vsel %vm1027, %v1111, %v1087
      %v1113 = vsel %vm1026, %v995, %v1110
      %v1114 = vsel %vm1026, 0, %v1112
      %v1115 = vcosq.f32.pop %v1113
      %v1116 = vsinq.f32.pop %v1113
      %vm1117 = vweird.f32 %v995
      %v1118 = vadd.s32 %v1114, 3
      %v1119 = vand.u32 %v1118, 3
      %vm1120 = vcmp.lt.s32.totalorder %v1119, 2
      %vm1121 = vcmp.eq.s32.totalorder %v1119, 0
      %v1122 = vxor.u32 %v1116, 2147483648
      %v1123 = vsel %vm1121, %v1115, %v1122
      %vm1124 = vcmp.eq.s32.totalorder %v1119, 2
      %v1125 = vxor.u32 %v1115, 2147483648
      %v1126 = vsel %vm1124, %v1125, %v1116
      %v1127 = vsel %vm1120, %v1123, %v1126
      %v1128 = vsel %vm1117, nan, %v1127
      %v1129 = vand.u32 2147483647, %v998
      %vm1130 = vcmp.le.f32.partialorder %v1129, 0.7853982
      %vm1131 = vcmp.lt.s32.totalorder %v998, 0
      %v1132 = vand.u32 %v998, 2139095040
      %v1133 = vshrl.u32 %v1132, 23
      %v1134 = vsub.s32 %v1133, 127
      %v1135 = vand.u32 2147483647, %v998
      %v1136 = vand.u32 %v1135, 8388607
      %v1137 = vor.u32 %v1136, 8388608
      %v1138 = vsub.s32 0, %v1137
      %v1139 = vadd.s32 %v1134, 1
      %vm1140 = vcmp.gt.s32.totalorder %v1139, 0
      %v1141 = vsel %vm1140, %v1139, 0
      %v1142 = vshrl.u32 %v1141, 5
      %v1143 = vand.u32 %v1141, 31
      %v1144 = vsub.s32 32, %v1143
      %v1145 = vshrl.u32 683565275, %v1144
      %v1146 = vshll.u32 683565275, %v1143
      %v1147 = vshrl.u32 2475754826, %v1144
      %v1148 = vor.u32 %v1146, %v1147
      %v1149 = vshll.u32 2475754826, %v1143
      %v1150 = vshrl.u32 2131351028, %v1144
      %v1151 = vor.u32 %v1149, %v1150
      %v1152 = vshll.u32 2131351028, %v1143
      %v1153 = vshrl.u32 2102212464, %v1144
      %v1154 = vor.u32 %v1152, %v1153
      %v1155 = vshll.u32 2102212464, %v1143
      %v1156 = vshrl.u32 920167782, %v1144
      %v1157 = vor.u32 %v1155, %v1156
      %v1158 = vshll.u32 920167782, %v1143
      %v1159 = vshrl.u32 1326507024, %v1144
      %v1160 = vor.u32 %v1158, %v1159
      %vm1161 = vcmp.lt.s32.totalorder %v1142, 1
      %vm1162 = vcmp.lt.s32.totalorder %v1142, 2
      %vm1163 = vcmp.lt.s32.totalorder %v1142, 3
      %vm1164 = vcmp.lt.s32.totalorder %v1142, 4
      %v1165 = vsel %vm1161, %v1145, %v1148
      %v1166 = vsel %vm1164, %v1154, 2102212464
      %v1167 = vsel %vm1163, %v1151, %v1166
      %v1168 = vsel %vm1162, %v1165, %v1167
      %v1169 = vsel %vm1161, %v1148, %v1151
      %v1170 = vsel %vm1164, %v1157, 920167782
      %v1171 = vsel %vm1163, %v1154, %v1170
      %v1172 = vsel %vm1162, %v1169, %v1171
      %v1173 = vsel %vm1161, %v1151, %v1154
      %v1174 = vsel %vm1164, %v1160, 1326507024
      %v1175 = vsel %vm1163, %v1157, %v1174
      %v1176 = vsel %vm1162, %v1173, %v1175
      %v1177 = vshll.u32 %v1137, 8
      %v1178 = vmul.u32.u64.compose %v1177, %v1176
      %v1179 = vextract.low.u32 %v1178
      %v1180 = vextract.high.u32 %v1178
      %v1181 = vmul.u32.u64.compose %v1177, %v1172
      %v1182 = vextract.low.u32 %v1181
      %v1183 = vextract.high.u32 %v1181
      %v1184 = vmul.u32 %v1177, %v1168
      %v1185 = vadd.s32 %v1180, %v1182
      %vm1186 = vc.u32 %v1180, %v1182
      %v1187 = vadd.s32 %v1183, 1
      %v1188 = vsel %vm1186, %v1187, %v1183
      %v1189 = vadd.s32 %v1184, %v1188
      %v1190 = vadd.s32 %v1189, 536870912
      %v1191 = vshrl.u32 %v1190, 30
      %v1192 = vshll.u32 %v1191, 30
      %v1193 = vsub.s32 %v1189, %v1192
      %vm1194 = vcmp.lt.s32.totalorder %v1193, 0
      %v1195 = vsub.s32 0, %v1193
      %v1196 = vsel %vm1194, %v1195, %v1193
      %v1197 = vclz %v1196
      %v1198 = vsub.s32 %v1197, 2
      %vm1199 = vcmp.gt.s32.totalorder 0, %v1198
      %v1200 = vsel %vm1199, 0, %v1198
      %v1201 = vsub.s32 32, %v1200
      %v1202 = vshll.u32 %v1193, %v1200
      %v1203 = vshrl.u32 %v1185, %v1201
      %v1204 = vor.u32 %v1202, %v1203
      %v1205 = vsub.s32 4294967266, %v1200
      %v1206 = vadd.s32 %v1205, 127
      %v1207 = vshll.u32 %v1206, 23
      %v1208 = vor.u32 4788187, %v1207
      %v1209 = vand.u32 2147483647, %v1208
      %v1211 = vcvt.s32.f32 %v1204
      %v1212 = vmul.f32 %v1211, %v1209
      %v1213 = vxor.u32 %v1212, 2147483648
      %v1214 = vsel %vm1131, %v1213, %v1212
      %v1215 = vsub.s32 4, %v1191
      %v1216 = vsel %vm1131, %v1215, %v1191
      %v1217 = vsel %vm1130, %v998, %v1214
      %v1218 = vsel %vm1130, 0, %v1216
      %v1219 = vcosq.f32.pop %v1217
      %v1220 = vsinq.f32.pop %v1217
      %vm1221 = vweird.f32 %v998
      %v1222 = vadd.s32 %v1218, 3
      %v1223 = vand.u32 %v1222, 3
      %vm1224 = vcmp.lt.s32.totalorder %v1223, 2
      %vm1225 = vcmp.eq.s32.totalorder %v1223, 0
      %v1226 = vxor.u32 %v1220, 2147483648
      %v1227 = vsel %vm1225, %v1219, %v1226
      %vm1228 = vcmp.eq.s32.totalorder %v1223, 2
      %v1229 = vxor.u32 %v1219, 2147483648
      %v1230 = vsel %vm1228, %v1229, %v1220
      %v1231 = vsel %vm1224, %v1227, %v1230
      %v1232 = vsel %vm1221, nan, %v1231
      %v1233 = vand.u32 2147483647, %v1003
      %vm1234 = vcmp.le.f32.partialorder %v1233, 0.7853982
      %vm1235 = vcmp.lt.s32.totalorder %v1003, 0
      %v1236 = vand.u32 %v1003, 2139095040
      %v1237 = vshrl.u32 %v1236, 23
      %v1238 = vsub.s32 %v1237, 127
      %v1239 = vand.u32 2147483647, %v1003
      %v1240 = vand.u32 %v1239, 8388607
      %v1241 = vor.u32 %v1240, 8388608
      %v1242 = vsub.s32 0, %v1241
      %v1243 = vadd.s32 %v1238, 1
      %vm1244 = vcmp.gt.s32.totalorder %v1243, 0
      %v1245 = vsel %vm1244, %v1243, 0
      %v1246 = vshrl.u32 %v1245, 5
      %v1247 = vand.u32 %v1245, 31
      %v1248 = vsub.s32 32, %v1247
      %v1249 = vshrl.u32 683565275, %v1248
      %v1250 = vshll.u32 683565275, %v1247
      %v1251 = vshrl.u32 2475754826, %v1248
      %v1252 = vor.u32 %v1250, %v1251
      %v1253 = vshll.u32 2475754826, %v1247
      %v1254 = vshrl.u32 2131351028, %v1248
      %v1255 = vor.u32 %v1253, %v1254
      %v1256 = vshll.u32 2131351028, %v1247
      %v1257 = vshrl.u32 2102212464, %v1248
      %v1258 = vor.u32 %v1256, %v1257
      %v1259 = vshll.u32 2102212464, %v1247
      %v1260 = vshrl.u32 920167782, %v1248
      %v1261 = vor.u32 %v1259, %v1260
      %v1262 = vshll.u32 920167782, %v1247
      %v1263 = vshrl.u32 1326507024, %v1248
      %v1264 = vor.u32 %v1262, %v1263
      %vm1265 = vcmp.lt.s32.totalorder %v1246, 1
      %vm1266 = vcmp.lt.s32.totalorder %v1246, 2
      %vm1267 = vcmp.lt.s32.totalorder %v1246, 3
      %vm1268 = vcmp.lt.s32.totalorder %v1246, 4
      %v1269 = vsel %vm1265, %v1249, %v1252
      %v1270 = vsel %vm1268, %v1258, 2102212464
      %v1271 = vsel %vm1267, %v1255, %v1270
      %v1272 = vsel %vm1266, %v1269, %v1271
      %v1273 = vsel %vm1265, %v1252, %v1255
      %v1274 = vsel %vm1268, %v1261, 920167782
      %v1275 = vsel %vm1267, %v1258, %v1274
      %v1276 = vsel %vm1266, %v1273, %v1275
      %v1277 = vsel %vm1265, %v1255, %v1258
      %v1278 = vsel %vm1268, %v1264, 1326507024
      %v1279 = vsel %vm1267, %v1261, %v1278
      %v1280 = vsel %vm1266, %v1277, %v1279
      %v1281 = vshll.u32 %v1241, 8
      %v1282 = vmul.u32.u64.compose %v1281, %v1280
      %v1283 = vextract.low.u32 %v1282
      %v1284 = vextract.high.u32 %v1282
      %v1285 = vmul.u32.u64.compose %v1281, %v1276
      %v1286 = vextract.low.u32 %v1285
      %v1287 = vextract.high.u32 %v1285
      %v1288 = vmul.u32 %v1281, %v1272
      %v1289 = vadd.s32 %v1284, %v1286
      %vm1290 = vc.u32 %v1284, %v1286
      %v1291 = vadd.s32 %v1287, 1
      %v1292 = vsel %vm1290, %v1291, %v1287
      %v1293 = vadd.s32 %v1288, %v1292
      %v1294 = vadd.s32 %v1293, 536870912
      %v1295 = vshrl.u32 %v1294, 30
      %v1296 = vshll.u32 %v1295, 30
      %v1297 = vsub.s32 %v1293, %v1296
      %vm1298 = vcmp.lt.s32.totalorder %v1297, 0
      %v1299 = vsub.s32 0, %v1297
      %v1300 = vsel %vm1298, %v1299, %v1297
      %v1301 = vclz %v1300
      %v1302 = vsub.s32 %v1301, 2
      %vm1303 = vcmp.gt.s32.totalorder 0, %v1302
      %v1304 = vsel %vm1303, 0, %v1302
      %v1305 = vsub.s32 32, %v1304
      %v1306 = vshll.u32 %v1297, %v1304
      %v1307 = vshrl.u32 %v1289, %v1305
      %v1308 = vor.u32 %v1306, %v1307
      %v1309 = vsub.s32 4294967266, %v1304
      %v1310 = vadd.s32 %v1309, 127
      %v1311 = vshll.u32 %v1310, 23
      %v1312 = vor.u32 4788187, %v1311
      %v1313 = vand.u32 2147483647, %v1312
      %v1315 = vcvt.s32.f32 %v1308
      %v1316 = vmul.f32 %v1315, %v1313
      %v1317 = vxor.u32 %v1316, 2147483648
      %v1318 = vsel %vm1235, %v1317, %v1316
      %v1319 = vsub.s32 4, %v1295
      %v1320 = vsel %vm1235, %v1319, %v1295
      %v1321 = vsel %vm1234, %v1003, %v1318
      %v1322 = vsel %vm1234, 0, %v1320
      %v1323 = vcosq.f32.pop %v1321
      %v1324 = vsinq.f32.pop %v1321
      %vm1325 = vweird.f32 %v1003
      %v1326 = vadd.s32 %v1322, 3
      %v1327 = vand.u32 %v1326, 3
      %vm1328 = vcmp.lt.s32.totalorder %v1327, 2
      %vm1329 = vcmp.eq.s32.totalorder %v1327, 0
      %v1330 = vxor.u32 %v1324, 2147483648
      %v1331 = vsel %vm1329, %v1323, %v1330
      %vm1332 = vcmp.eq.s32.totalorder %v1327, 2
      %v1333 = vxor.u32 %v1323, 2147483648
      %v1334 = vsel %vm1332, %v1333, %v1324
      %v1335 = vsel %vm1328, %v1331, %v1334
      %v1336 = vsel %vm1325, nan, %v1335
      %v1337 = vand.u32 2147483647, %v1006
      %vm1338 = vcmp.le.f32.partialorder %v1337, 0.7853982
      %vm1339 = vcmp.lt.s32.totalorder %v1006, 0
      %v1340 = vand.u32 %v1006, 2139095040
      %v1341 = vshrl.u32 %v1340, 23
      %v1342 = vsub.s32 %v1341, 127
      %v1343 = vand.u32 2147483647, %v1006
      %v1344 = vand.u32 %v1343, 8388607
      %v1345 = vor.u32 %v1344, 8388608
      %v1346 = vsub.s32 0, %v1345
      %v1347 = vadd.s32 %v1342, 1
      %vm1348 = vcmp.gt.s32.totalorder %v1347, 0
      %v1349 = vsel %vm1348, %v1347, 0
      %v1350 = vshrl.u32 %v1349, 5
      %v1351 = vand.u32 %v1349, 31
      %v1352 = vsub.s32 32, %v1351
      %v1353 = vshrl.u32 683565275, %v1352
      %v1354 = vshll.u32 683565275, %v1351
      %v1355 = vshrl.u32 2475754826, %v1352
      %v1356 = vor.u32 %v1354, %v1355
      %v1357 = vshll.u32 2475754826, %v1351
      %v1358 = vshrl.u32 2131351028, %v1352
      %v1359 = vor.u32 %v1357, %v1358
      %v1360 = vshll.u32 2131351028, %v1351
      %v1361 = vshrl.u32 2102212464, %v1352
      %v1362 = vor.u32 %v1360, %v1361
      %v1363 = vshll.u32 2102212464, %v1351
      %v1364 = vshrl.u32 920167782, %v1352
      %v1365 = vor.u32 %v1363, %v1364
      %v1366 = vshll.u32 920167782, %v1351
      %v1367 = vshrl.u32 1326507024, %v1352
      %v1368 = vor.u32 %v1366, %v1367
      %vm1369 = vcmp.lt.s32.totalorder %v1350, 1
      %vm1370 = vcmp.lt.s32.totalorder %v1350, 2
      %vm1371 = vcmp.lt.s32.totalorder %v1350, 3
      %vm1372 = vcmp.lt.s32.totalorder %v1350, 4
      %v1373 = vsel %vm1369, %v1353, %v1356
      %v1374 = vsel %vm1372, %v1362, 2102212464
      %v1375 = vsel %vm1371, %v1359, %v1374
      %v1376 = vsel %vm1370, %v1373, %v1375
      %v1377 = vsel %vm1369, %v1356, %v1359
      %v1378 = vsel %vm1372, %v1365, 920167782
      %v1379 = vsel %vm1371, %v1362, %v1378
      %v1380 = vsel %vm1370, %v1377, %v1379
      %v1381 = vsel %vm1369, %v1359, %v1362
      %v1382 = vsel %vm1372, %v1368, 1326507024
      %v1383 = vsel %vm1371, %v1365, %v1382
      %v1384 = vsel %vm1370, %v1381, %v1383
      %v1385 = vshll.u32 %v1345, 8
      %v1386 = vmul.u32.u64.compose %v1385, %v1384
      %v1387 = vextract.low.u32 %v1386
      %v1388 = vextract.high.u32 %v1386
      %v1389 = vmul.u32.u64.compose %v1385, %v1380
      %v1390 = vextract.low.u32 %v1389
      %v1391 = vextract.high.u32 %v1389
      %v1392 = vmul.u32 %v1385, %v1376
      %v1393 = vadd.s32 %v1388, %v1390
      %vm1394 = vc.u32 %v1388, %v1390
      %v1395 = vadd.s32 %v1391, 1
      %v1396 = vsel %vm1394, %v1395, %v1391
      %v1397 = vadd.s32 %v1392, %v1396
      %v1398 = vadd.s32 %v1397, 536870912
      %v1399 = vshrl.u32 %v1398, 30
      %v1400 = vshll.u32 %v1399, 30
      %v1401 = vsub.s32 %v1397, %v1400
      %vm1402 = vcmp.lt.s32.totalorder %v1401, 0
      %v1403 = vsub.s32 0, %v1401
      %v1404 = vsel %vm1402, %v1403, %v1401
      %v1405 = vclz %v1404
      %v1406 = vsub.s32 %v1405, 2
      %vm1407 = vcmp.gt.s32.totalorder 0, %v1406
      %v1408 = vsel %vm1407, 0, %v1406
      %v1409 = vsub.s32 32, %v1408
      %v1410 = vshll.u32 %v1401, %v1408
      %v1411 = vshrl.u32 %v1393, %v1409
      %v1412 = vor.u32 %v1410, %v1411
      %v1413 = vsub.s32 4294967266, %v1408
      %v1414 = vadd.s32 %v1413, 127
      %v1415 = vshll.u32 %v1414, 23
      %v1416 = vor.u32 4788187, %v1415
      %v1417 = vand.u32 2147483647, %v1416
      %v1419 = vcvt.s32.f32 %v1412
      %v1420 = vmul.f32 %v1419, %v1417
      %v1421 = vxor.u32 %v1420, 2147483648
      %v1422 = vsel %vm1339, %v1421, %v1420
      %v1423 = vsub.s32 4, %v1399
      %v1424 = vsel %vm1339, %v1423, %v1399
      %v1425 = vsel %vm1338, %v1006, %v1422
      %v1426 = vsel %vm1338, 0, %v1424
      %v1427 = vcosq.f32.pop %v1425
      %v1428 = vsinq.f32.pop %v1425
      %vm1429 = vweird.f32 %v1006
      %v1430 = vadd.s32 %v1426, 3
      %v1431 = vand.u32 %v1430, 3
      %vm1432 = vcmp.lt.s32.totalorder %v1431, 2
      %vm1433 = vcmp.eq.s32.totalorder %v1431, 0
      %v1434 = vxor.u32 %v1428, 2147483648
      %v1435 = vsel %vm1433, %v1427, %v1434
      %vm1436 = vcmp.eq.s32.totalorder %v1431, 2
      %v1437 = vxor.u32 %v1427, 2147483648
      %v1438 = vsel %vm1436, %v1437, %v1428
      %v1439 = vsel %vm1432, %v1435, %v1438
      %v1440 = vsel %vm1429, nan, %v1439
      %v1441 = vand.u32 2147483647, %v1011
      %vm1442 = vcmp.le.f32.partialorder %v1441, 0.7853982
      %vm1443 = vcmp.lt.s32.totalorder %v1011, 0
      %v1444 = vand.u32 %v1011, 2139095040
      %v1445 = vshrl.u32 %v1444, 23
      %v1446 = vsub.s32 %v1445, 127
      %v1447 = vand.u32 2147483647, %v1011
      %v1448 = vand.u32 %v1447, 8388607
      %v1449 = vor.u32 %v1448, 8388608
      %v1450 = vsub.s32 0, %v1449
      %v1451 = vadd.s32 %v1446, 1
      %vm1452 = vcmp.gt.s32.totalorder %v1451, 0
      %v1453 = vsel %vm1452, %v1451, 0
      %v1454 = vshrl.u32 %v1453, 5
      %v1455 = vand.u32 %v1453, 31
      %v1456 = vsub.s32 32, %v1455
      %v1457 = vshrl.u32 683565275, %v1456
      %v1458 = vshll.u32 683565275, %v1455
      %v1459 = vshrl.u32 2475754826, %v1456
      %v1460 = vor.u32 %v1458, %v1459
      %v1461 = vshll.u32 2475754826, %v1455
      %v1462 = vshrl.u32 2131351028, %v1456
      %v1463 = vor.u32 %v1461, %v1462
      %v1464 = vshll.u32 2131351028, %v1455
      %v1465 = vshrl.u32 2102212464, %v1456
      %v1466 = vor.u32 %v1464, %v1465
      %v1467 = vshll.u32 2102212464, %v1455
      %v1468 = vshrl.u32 920167782, %v1456
      %v1469 = vor.u32 %v1467, %v1468
      %v1470 = vshll.u32 920167782, %v1455
      %v1471 = vshrl.u32 1326507024, %v1456
      %v1472 = vor.u32 %v1470, %v1471
      %vm1473 = vcmp.lt.s32.totalorder %v1454, 1
      %vm1474 = vcmp.lt.s32.totalorder %v1454, 2
      %vm1475 = vcmp.lt.s32.totalorder %v1454, 3
      %vm1476 = vcmp.lt.s32.totalorder %v1454, 4
      %v1477 = vsel %vm1473, %v1457, %v1460
      %v1478 = vsel %vm1476, %v1466, 2102212464
      %v1479 = vsel %vm1475, %v1463, %v1478
      %v1480 = vsel %vm1474, %v1477, %v1479
      %v1481 = vsel %vm1473, %v1460, %v1463
      %v1482 = vsel %vm1476, %v1469, 920167782
      %v1483 = vsel %vm1475, %v1466, %v1482
      %v1484 = vsel %vm1474, %v1481, %v1483
      %v1485 = vsel %vm1473, %v1463, %v1466
      %v1486 = vsel %vm1476, %v1472, 1326507024
      %v1487 = vsel %vm1475, %v1469, %v1486
      %v1488 = vsel %vm1474, %v1485, %v1487
      %v1489 = vshll.u32 %v1449, 8
      %v1490 = vmul.u32.u64.compose %v1489, %v1488
      %v1491 = vextract.low.u32 %v1490
      %v1492 = vextract.high.u32 %v1490
      %v1493 = vmul.u32.u64.compose %v1489, %v1484
      %v1494 = vextract.low.u32 %v1493
      %v1495 = vextract.high.u32 %v1493
      %v1496 = vmul.u32 %v1489, %v1480
      %v1497 = vadd.s32 %v1492, %v1494
      %vm1498 = vc.u32 %v1492, %v1494
      %v1499 = vadd.s32 %v1495, 1
      %v1500 = vsel %vm1498, %v1499, %v1495
      %v1501 = vadd.s32 %v1496, %v1500
      %v1502 = vadd.s32 %v1501, 536870912
      %v1503 = vshrl.u32 %v1502, 30
      %v1504 = vshll.u32 %v1503, 30
      %v1505 = vsub.s32 %v1501, %v1504
      %vm1506 = vcmp.lt.s32.totalorder %v1505, 0
      %v1507 = vsub.s32 0, %v1505
      %v1508 = vsel %vm1506, %v1507, %v1505
      %v1509 = vclz %v1508
      %v1510 = vsub.s32 %v1509, 2
      %vm1511 = vcmp.gt.s32.totalorder 0, %v1510
      %v1512 = vsel %vm1511, 0, %v1510
      %v1513 = vsub.s32 32, %v1512
      %v1514 = vshll.u32 %v1505, %v1512
      %v1515 = vshrl.u32 %v1497, %v1513
      %v1516 = vor.u32 %v1514, %v1515
      %v1517 = vsub.s32 4294967266, %v1512
      %v1518 = vadd.s32 %v1517, 127
      %v1519 = vshll.u32 %v1518, 23
      %v1520 = vor.u32 4788187, %v1519
      %v1521 = vand.u32 2147483647, %v1520
      %v1523 = vcvt.s32.f32 %v1516
      %v1524 = vmul.f32 %v1523, %v1521
      %v1525 = vxor.u32 %v1524, 2147483648
      %v1526 = vsel %vm1443, %v1525, %v1524
      %v1527 = vsub.s32 4, %v1503
      %v1528 = vsel %vm1443, %v1527, %v1503
      %v1529 = vsel %vm1442, %v1011, %v1526
      %v1530 = vsel %vm1442, 0, %v1528
      %v1531 = vcosq.f32.pop %v1529
      %v1532 = vsinq.f32.pop %v1529
      %vm1533 = vweird.f32 %v1011
      %v1534 = vadd.s32 %v1530, 3
      %v1535 = vand.u32 %v1534, 3
      %vm1536 = vcmp.lt.s32.totalorder %v1535, 2
      %vm1537 = vcmp.eq.s32.totalorder %v1535, 0
      %v1538 = vxor.u32 %v1532, 2147483648
      %v1539 = vsel %vm1537, %v1531, %v1538
      %vm1540 = vcmp.eq.s32.totalorder %v1535, 2
      %v1541 = vxor.u32 %v1531, 2147483648
      %v1542 = vsel %vm1540, %v1541, %v1532
      %v1543 = vsel %vm1536, %v1539, %v1542
      %v1544 = vsel %vm1533, nan, %v1543
      %v1545 = vand.u32 2147483647, %v1014
      %vm1546 = vcmp.le.f32.partialorder %v1545, 0.7853982
      %vm1547 = vcmp.lt.s32.totalorder %v1014, 0
      %v1548 = vand.u32 %v1014, 2139095040
      %v1549 = vshrl.u32 %v1548, 23
      %v1550 = vsub.s32 %v1549, 127
      %v1551 = vand.u32 2147483647, %v1014
      %v1552 = vand.u32 %v1551, 8388607
      %v1553 = vor.u32 %v1552, 8388608
      %v1554 = vsub.s32 0, %v1553
      %v1555 = vadd.s32 %v1550, 1
      %vm1556 = vcmp.gt.s32.totalorder %v1555, 0
      %v1557 = vsel %vm1556, %v1555, 0
      %v1558 = vshrl.u32 %v1557, 5
      %v1559 = vand.u32 %v1557, 31
      %v1560 = vsub.s32 32, %v1559
      %v1561 = vshrl.u32 683565275, %v1560
      %v1562 = vshll.u32 683565275, %v1559
      %v1563 = vshrl.u32 2475754826, %v1560
      %v1564 = vor.u32 %v1562, %v1563
      %v1565 = vshll.u32 2475754826, %v1559
      %v1566 = vshrl.u32 2131351028, %v1560
      %v1567 = vor.u32 %v1565, %v1566
      %v1568 = vshll.u32 2131351028, %v1559
      %v1569 = vshrl.u32 2102212464, %v1560
      %v1570 = vor.u32 %v1568, %v1569
      %v1571 = vshll.u32 2102212464, %v1559
      %v1572 = vshrl.u32 920167782, %v1560
      %v1573 = vor.u32 %v1571, %v1572
      %v1574 = vshll.u32 920167782, %v1559
      %v1575 = vshrl.u32 1326507024, %v1560
      %v1576 = vor.u32 %v1574, %v1575
      %vm1577 = vcmp.lt.s32.totalorder %v1558, 1
      %vm1578 = vcmp.lt.s32.totalorder %v1558, 2
      %vm1579 = vcmp.lt.s32.totalorder %v1558, 3
      %vm1580 = vcmp.lt.s32.totalorder %v1558, 4
      %v1581 = vsel %vm1577, %v1561, %v1564
      %v1582 = vsel %vm1580, %v1570, 2102212464
      %v1583 = vsel %vm1579, %v1567, %v1582
      %v1584 = vsel %vm1578, %v1581, %v1583
      %v1585 = vsel %vm1577, %v1564, %v1567
      %v1586 = vsel %vm1580, %v1573, 920167782
      %v1587 = vsel %vm1579, %v1570, %v1586
      %v1588 = vsel %vm1578, %v1585, %v1587
      %v1589 = vsel %vm1577, %v1567, %v1570
      %v1590 = vsel %vm1580, %v1576, 1326507024
      %v1591 = vsel %vm1579, %v1573, %v1590
      %v1592 = vsel %vm1578, %v1589, %v1591
      %v1593 = vshll.u32 %v1553, 8
      %v1594 = vmul.u32.u64.compose %v1593, %v1592
      %v1595 = vextract.low.u32 %v1594
      %v1596 = vextract.high.u32 %v1594
      %v1597 = vmul.u32.u64.compose %v1593, %v1588
      %v1598 = vextract.low.u32 %v1597
      %v1599 = vextract.high.u32 %v1597
      %v1600 = vmul.u32 %v1593, %v1584
      %v1601 = vadd.s32 %v1596, %v1598
      %vm1602 = vc.u32 %v1596, %v1598
      %v1603 = vadd.s32 %v1599, 1
      %v1604 = vsel %vm1602, %v1603, %v1599
      %v1605 = vadd.s32 %v1600, %v1604
      %v1606 = vadd.s32 %v1605, 536870912
      %v1607 = vshrl.u32 %v1606, 30
      %v1608 = vshll.u32 %v1607, 30
      %v1609 = vsub.s32 %v1605, %v1608
      %vm1610 = vcmp.lt.s32.totalorder %v1609, 0
      %v1611 = vsub.s32 0, %v1609
      %v1612 = vsel %vm1610, %v1611, %v1609
      %v1613 = vclz %v1612
      %v1614 = vsub.s32 %v1613, 2
      %vm1615 = vcmp.gt.s32.totalorder 0, %v1614
      %v1616 = vsel %vm1615, 0, %v1614
      %v1617 = vsub.s32 32, %v1616
      %v1618 = vshll.u32 %v1609, %v1616
      %v1619 = vshrl.u32 %v1601, %v1617
      %v1620 = vor.u32 %v1618, %v1619
      %v1621 = vsub.s32 4294967266, %v1616
      %v1622 = vadd.s32 %v1621, 127
      %v1623 = vshll.u32 %v1622, 23
      %v1624 = vor.u32 4788187, %v1623
      %v1625 = vand.u32 2147483647, %v1624
      %v1627 = vcvt.s32.f32 %v1620
      %v1628 = vmul.f32 %v1627, %v1625
      %v1629 = vxor.u32 %v1628, 2147483648
      %v1630 = vsel %vm1547, %v1629, %v1628
      %v1631 = vsub.s32 4, %v1607
      %v1632 = vsel %vm1547, %v1631, %v1607
      %v1633 = vsel %vm1546, %v1014, %v1630
      %v1634 = vsel %vm1546, 0, %v1632
      %v1635 = vcosq.f32.pop %v1633
      %v1636 = vsinq.f32.pop %v1633
      %vm1637 = vweird.f32 %v1014
      %v1638 = vadd.s32 %v1634, 3
      %v1639 = vand.u32 %v1638, 3
      %vm1640 = vcmp.lt.s32.totalorder %v1639, 2
      %vm1641 = vcmp.eq.s32.totalorder %v1639, 0
      %v1642 = vxor.u32 %v1636, 2147483648
      %v1643 = vsel %vm1641, %v1635, %v1642
      %vm1644 = vcmp.eq.s32.totalorder %v1639, 2
      %v1645 = vxor.u32 %v1635, 2147483648
      %v1646 = vsel %vm1644, %v1645, %v1636
      %v1647 = vsel %vm1640, %v1643, %v1646
      %v1648 = vsel %vm1637, nan, %v1647
      %v1649 = vand.u32 2147483647, %v1019
      %vm1650 = vcmp.le.f32.partialorder %v1649, 0.7853982
      %vm1651 = vcmp.lt.s32.totalorder %v1019, 0
      %v1652 = vand.u32 %v1019, 2139095040
      %v1653 = vshrl.u32 %v1652, 23
      %v1654 = vsub.s32 %v1653, 127
      %v1655 = vand.u32 2147483647, %v1019
      %v1656 = vand.u32 %v1655, 8388607
      %v1657 = vor.u32 %v1656, 8388608
      %v1658 = vsub.s32 0, %v1657
      %v1659 = vadd.s32 %v1654, 1
      %vm1660 = vcmp.gt.s32.totalorder %v1659, 0
      %v1661 = vsel %vm1660, %v1659, 0
      %v1662 = vshrl.u32 %v1661, 5
      %v1663 = vand.u32 %v1661, 31
      %v1664 = vsub.s32 32, %v1663
      %v1665 = vshrl.u32 683565275, %v1664
      %v1666 = vshll.u32 683565275, %v1663
      %v1667 = vshrl.u32 2475754826, %v1664
      %v1668 = vor.u32 %v1666, %v1667
      %v1669 = vshll.u32 2475754826, %v1663
      %v1670 = vshrl.u32 2131351028, %v1664
      %v1671 = vor.u32 %v1669, %v1670
      %v1672 = vshll.u32 2131351028, %v1663
      %v1673 = vshrl.u32 2102212464, %v1664
      %v1674 = vor.u32 %v1672, %v1673
      %v1675 = vshll.u32 2102212464, %v1663
      %v1676 = vshrl.u32 920167782, %v1664
      %v1677 = vor.u32 %v1675, %v1676
      %v1678 = vshll.u32 920167782, %v1663
      %v1679 = vshrl.u32 1326507024, %v1664
      %v1680 = vor.u32 %v1678, %v1679
      %vm1681 = vcmp.lt.s32.totalorder %v1662, 1
      %vm1682 = vcmp.lt.s32.totalorder %v1662, 2
      %vm1683 = vcmp.lt.s32.totalorder %v1662, 3
      %vm1684 = vcmp.lt.s32.totalorder %v1662, 4
      %v1685 = vsel %vm1681, %v1665, %v1668
      %v1686 = vsel %vm1684, %v1674, 2102212464
      %v1687 = vsel %vm1683, %v1671, %v1686
      %v1688 = vsel %vm1682, %v1685, %v1687
      %v1689 = vsel %vm1681, %v1668, %v1671
      %v1690 = vsel %vm1684, %v1677, 920167782
      %v1691 = vsel %vm1683, %v1674, %v1690
      %v1692 = vsel %vm1682, %v1689, %v1691
      %v1693 = vsel %vm1681, %v1671, %v1674
      %v1694 = vsel %vm1684, %v1680, 1326507024
      %v1695 = vsel %vm1683, %v1677, %v1694
      %v1696 = vsel %vm1682, %v1693, %v1695
      %v1697 = vshll.u32 %v1657, 8
      %v1698 = vmul.u32.u64.compose %v1697, %v1696
      %v1699 = vextract.low.u32 %v1698
      %v1700 = vextract.high.u32 %v1698
      %v1701 = vmul.u32.u64.compose %v1697, %v1692
      %v1702 = vextract.low.u32 %v1701
      %v1703 = vextract.high.u32 %v1701
      %v1704 = vmul.u32 %v1697, %v1688
      %v1705 = vadd.s32 %v1700, %v1702
      %vm1706 = vc.u32 %v1700, %v1702
      %v1707 = vadd.s32 %v1703, 1
      %v1708 = vsel %vm1706, %v1707, %v1703
      %v1709 = vadd.s32 %v1704, %v1708
      %v1710 = vadd.s32 %v1709, 536870912
      %v1711 = vshrl.u32 %v1710, 30
      %v1712 = vshll.u32 %v1711, 30
      %v1713 = vsub.s32 %v1709, %v1712
      %vm1714 = vcmp.lt.s32.totalorder %v1713, 0
      %v1715 = vsub.s32 0, %v1713
      %v1716 = vsel %vm1714, %v1715, %v1713
      %v1717 = vclz %v1716
      %v1718 = vsub.s32 %v1717, 2
      %vm1719 = vcmp.gt.s32.totalorder 0, %v1718
      %v1720 = vsel %vm1719, 0, %v1718
      %v1721 = vsub.s32 32, %v1720
      %v1722 = vshll.u32 %v1713, %v1720
      %v1723 = vshrl.u32 %v1705, %v1721
      %v1724 = vor.u32 %v1722, %v1723
      %v1725 = vsub.s32 4294967266, %v1720
      %v1726 = vadd.s32 %v1725, 127
      %v1727 = vshll.u32 %v1726, 23
      %v1728 = vor.u32 4788187, %v1727
      %v1729 = vand.u32 2147483647, %v1728
      %v1731 = vcvt.s32.f32 %v1724
      %v1732 = vmul.f32 %v1731, %v1729
      %v1733 = vxor.u32 %v1732, 2147483648
      %v1734 = vsel %vm1651, %v1733, %v1732
      %v1735 = vsub.s32 4, %v1711
      %v1736 = vsel %vm1651, %v1735, %v1711
      %v1737 = vsel %vm1650, %v1019, %v1734
      %v1738 = vsel %vm1650, 0, %v1736
      %v1739 = vcosq.f32.pop %v1737
      %v1740 = vsinq.f32.pop %v1737
      %vm1741 = vweird.f32 %v1019
      %v1742 = vadd.s32 %v1738, 3
      %v1743 = vand.u32 %v1742, 3
      %vm1744 = vcmp.lt.s32.totalorder %v1743, 2
      %vm1745 = vcmp.eq.s32.totalorder %v1743, 0
      %v1746 = vxor.u32 %v1740, 2147483648
      %v1747 = vsel %vm1745, %v1739, %v1746
      %vm1748 = vcmp.eq.s32.totalorder %v1743, 2
      %v1749 = vxor.u32 %v1739, 2147483648
      %v1750 = vsel %vm1748, %v1749, %v1740
      %v1751 = vsel %vm1744, %v1747, %v1750
      %v1752 = vsel %vm1741, nan, %v1751
      %v1753 = vand.u32 2147483647, %v1022
      %vm1754 = vcmp.le.f32.partialorder %v1753, 0.7853982
      %vm1755 = vcmp.lt.s32.totalorder %v1022, 0
      %v1756 = vand.u32 %v1022, 2139095040
      %v1757 = vshrl.u32 %v1756, 23
      %v1758 = vsub.s32 %v1757, 127
      %v1759 = vand.u32 2147483647, %v1022
      %v1760 = vand.u32 %v1759, 8388607
      %v1761 = vor.u32 %v1760, 8388608
      %v1762 = vsub.s32 0, %v1761
      %v1763 = vadd.s32 %v1758, 1
      %vm1764 = vcmp.gt.s32.totalorder %v1763, 0
      %v1765 = vsel %vm1764, %v1763, 0
      %v1766 = vshrl.u32 %v1765, 5
      %v1767 = vand.u32 %v1765, 31
      %v1768 = vsub.s32 32, %v1767
      %v1769 = vshrl.u32 683565275, %v1768
      %v1770 = vshll.u32 683565275, %v1767
      %v1771 = vshrl.u32 2475754826, %v1768
      %v1772 = vor.u32 %v1770, %v1771
      %v1773 = vshll.u32 2475754826, %v1767
      %v1774 = vshrl.u32 2131351028, %v1768
      %v1775 = vor.u32 %v1773, %v1774
      %v1776 = vshll.u32 2131351028, %v1767
      %v1777 = vshrl.u32 2102212464, %v1768
      %v1778 = vor.u32 %v1776, %v1777
      %v1779 = vshll.u32 2102212464, %v1767
      %v1780 = vshrl.u32 920167782, %v1768
      %v1781 = vor.u32 %v1779, %v1780
      %v1782 = vshll.u32 920167782, %v1767
      %v1783 = vshrl.u32 1326507024, %v1768
      %v1784 = vor.u32 %v1782, %v1783
      %vm1785 = vcmp.lt.s32.totalorder %v1766, 1
      %vm1786 = vcmp.lt.s32.totalorder %v1766, 2
      %vm1787 = vcmp.lt.s32.totalorder %v1766, 3
      %vm1788 = vcmp.lt.s32.totalorder %v1766, 4
      %v1789 = vsel %vm1785, %v1769, %v1772
      %v1790 = vsel %vm1788, %v1778, 2102212464
      %v1791 = vsel %vm1787, %v1775, %v1790
      %v1792 = vsel %vm1786, %v1789, %v1791
      %v1793 = vsel %vm1785, %v1772, %v1775
      %v1794 = vsel %vm1788, %v1781, 920167782
      %v1795 = vsel %vm1787, %v1778, %v1794
      %v1796 = vsel %vm1786, %v1793, %v1795
      %v1797 = vsel %vm1785, %v1775, %v1778
      %v1798 = vsel %vm1788, %v1784, 1326507024
      %v1799 = vsel %vm1787, %v1781, %v1798
      %v1800 = vsel %vm1786, %v1797, %v1799
      %v1801 = vshll.u32 %v1761, 8
      %v1802 = vmul.u32.u64.compose %v1801, %v1800
      %v1803 = vextract.low.u32 %v1802
      %v1804 = vextract.high.u32 %v1802
      %v1805 = vmul.u32.u64.compose %v1801, %v1796
      %v1806 = vextract.low.u32 %v1805
      %v1807 = vextract.high.u32 %v1805
      %v1808 = vmul.u32 %v1801, %v1792
      %v1809 = vadd.s32 %v1804, %v1806
      %vm1810 = vc.u32 %v1804, %v1806
      %v1811 = vadd.s32 %v1807, 1
      %v1812 = vsel %vm1810, %v1811, %v1807
      %v1813 = vadd.s32 %v1808, %v1812
      %v1814 = vadd.s32 %v1813, 536870912
      %v1815 = vshrl.u32 %v1814, 30
      %v1816 = vshll.u32 %v1815, 30
      %v1817 = vsub.s32 %v1813, %v1816
      %vm1818 = vcmp.lt.s32.totalorder %v1817, 0
      %v1819 = vsub.s32 0, %v1817
      %v1820 = vsel %vm1818, %v1819, %v1817
      %v1821 = vclz %v1820
      %v1822 = vsub.s32 %v1821, 2
      %vm1823 = vcmp.gt.s32.totalorder 0, %v1822
      %v1824 = vsel %vm1823, 0, %v1822
      %v1825 = vsub.s32 32, %v1824
      %v1826 = vshll.u32 %v1817, %v1824
      %v1827 = vshrl.u32 %v1809, %v1825
      %v1828 = vor.u32 %v1826, %v1827
      %v1829 = vsub.s32 4294967266, %v1824
      %v1830 = vadd.s32 %v1829, 127
      %v1831 = vshll.u32 %v1830, 23
      %v1832 = vor.u32 4788187, %v1831
      %v1833 = vand.u32 2147483647, %v1832
      %v1835 = vcvt.s32.f32 %v1828
      %v1836 = vmul.f32 %v1835, %v1833
      %v1837 = vxor.u32 %v1836, 2147483648
      %v1838 = vsel %vm1755, %v1837, %v1836
      %v1839 = vsub.s32 4, %v1815
      %v1840 = vsel %vm1755, %v1839, %v1815
      %v1841 = vsel %vm1754, %v1022, %v1838
      %v1842 = vsel %vm1754, 0, %v1840
      %v1843 = vcosq.f32.pop %v1841
      %v1844 = vsinq.f32.pop %v1841
      %vm1845 = vweird.f32 %v1022
      %v1846 = vadd.s32 %v1842, 3
      %v1847 = vand.u32 %v1846, 3
      %vm1848 = vcmp.lt.s32.totalorder %v1847, 2
      %vm1849 = vcmp.eq.s32.totalorder %v1847, 0
      %v1850 = vxor.u32 %v1844, 2147483648
      %v1851 = vsel %vm1849, %v1843, %v1850
      %vm1852 = vcmp.eq.s32.totalorder %v1847, 2
      %v1853 = vxor.u32 %v1843, 2147483648
      %v1854 = vsel %vm1852, %v1853, %v1844
      %v1855 = vsel %vm1848, %v1851, %v1854
      %v1856 = vsel %vm1845, nan, %v1855
      %v1857 = vpack.c.bf16 %v1128, %v1128
      %v1858 = vpack.c.bf16 %v1232, %v1232
      %v1859 = vpack.c.bf16 %v1336, %v1336
      %v1860 = vpack.c.bf16 %v1440, %v1440
      %v1861 = vpack.c.bf16 %v1544, %v1544
      %v1862 = vpack.c.bf16 %v1648, %v1648
      %v1863 = vpack.c.bf16 %v1752, %v1752
      %v1864 = vpack.c.bf16 %v1856, %v1856
      %vm1865 = vcmask 257024
      %1866 = vst.msk [vmem:[%s192] sm:$0xf] %vm1865, %v1857
      %1867 = vst.msk [vmem:[%s192 + $0x4] sm:$0xf] %vm1865, %v1858
      %1868 = vst.msk [vmem:[%s192 + $0x8] sm:$0xf] %vm1865, %v1859
      %1869 = vst.msk [vmem:[%s192 + $0xc] sm:$0xf] %vm1865, %v1860
      %1870 = vst.msk [vmem:[%s192 + $0x10] sm:$0xf] %vm1865, %v1861
      %1871 = vst.msk [vmem:[%s192 + $0x14] sm:$0xf] %vm1865, %v1862
      %1872 = vst.msk [vmem:[%s192 + $0x18] sm:$0xf] %vm1865, %v1863
      %1873 = vst.msk [vmem:[%s192 + $0x1c] sm:$0xf] %vm1865, %v1864
      %s1874 = smul.u32 8, %s19
      %p1875 = scmp.lt.s32.totalorder %s18, 1
      %s1876 = scalar_select %p1875, %s18, 1
      %p1877 = scmp.lt.s32.totalorder %s1874, 7
      %s1878 = scalar_select %p1877, %s1874, 7
      %s1879 = smul.addr %s1876, 8
      %s1880 = sadd.s32 %s1878, %s1879
      %s1881 = smul.addr %s1880, 4
      %s1882 = scalar_lea.vmem %s3, %s1881
      // Predicated region
      $region33: #{conv_recover_block_forward.1} parent=31 // pred_check
        %p1883 = pneg %p114
      $region34: #{conv_recover_block_forward.1} parent=31 // pred_check_branch
        %1885 = sbr.rel (%p1883) target = $region36
      $region35: #{conv_recover_block_forward.1} parent=31 // pred_region
        %s1886 = smul.u32 8, %s19
      $region36: #{conv_recover_block_forward.1} parent=31 // pred_fallthru
        _
    $region32: #{conv_recover_block_forward.1} parent=5 // pred_fallthru
      _
    %p1887 = scmp.le.s32.totalorder 2, %s9
    // Predicated region
    $region37: #{conv_recover_block_forward.1} parent=5 // pred_check
      %p1888 = pneg %p1887
    $region38: #{conv_recover_block_forward.1} parent=5 // pred_check_branch
      %1890 = sbr.rel (%p1888) target = $region40
    $region39: #{conv_recover_block_forward.1} parent=5 // pred_region
      %s1891 = ssub.s32 %s9, 2
      // Predicated region
      $region41: #{conv_recover_block_forward.1} parent=39 // pred_check
        %p1892 = pneg %p120
      $region42: #{conv_recover_block_forward.1} parent=39 // pred_check_branch
        %1894 = sbr.rel (%p1892) target = $region44
      $region43: #{conv_recover_block_forward.1} parent=39 // pred_region
        %s1895 = smul.u32 8, %s21
        %p1896 = scmp.lt.s32.totalorder %s20, 1
        %s1897 = scalar_select %p1896, %s20, 1
        %p1898 = scmp.lt.s32.totalorder %s1895, 7
        %s1899 = scalar_select %p1898, %s1895, 7
        %s1900 = smul.addr %s1897, 8
        %s1901 = sadd.s32 %s1899, %s1900
        %s1902 = smul.addr %s1901, 4
        %s1903 = scalar_lea.vmem %s3, %s1902
      $region44: #{conv_recover_block_forward.1} parent=39 // pred_fallthru
        _
    $region40: #{conv_recover_block_forward.1} parent=5 // pred_fallthru
      _
  $region6: #{conv_recover_block_forward.1} parent=0 // loop_footer
    %s13 = sadd.s32 1, %s9
  $region7: #{conv_recover_block_forward.1} parent=0 // loop_footer_branch
    %8 = sbr.rel target = $region3
  $region8: #{conv_recover_block_forward.1} parent=0 // loop_exit
    _

</llo_original>
